<compile_context>
chip_gen: v7x
topology: tpu7x:2x2x1
jax: 0.10.0
libtpu: 0.0.40
codegen_flags: <defaults>
</compile_context>

<pallas_src>
import jax
import jax.numpy as jnp
from jax.experimental import pallas as pl
from jax.experimental.pallas import tpu as pltpu


def fwfm_kernel(x_ref, w_ref, o_ref):
    # x_ref: [TILE_B, F*D]  flattened field embeddings for one tile of samples
    # w_ref: [F*D, F*D]     kron(triu(r,1), I_D).T -- VMEM-resident, same every step
    # o_ref: [1, TILE_B]    per-sample interaction scores (lane-dense output)
    x = x_ref[...]
    t = jnp.dot(x, w_ref[...], preferred_element_type=jnp.float32)  # MXU matmul
    # Row-wise quadratic form; each output lane depends only on its own row, so
    # garbage rows of a ragged last tile only touch discarded output lanes.
    y = jnp.sum(t * x, axis=1)                                       # f32 VPU mul + reduce
    o_ref[0, :] = y


def fwfm_forward(x, r, *, tile_b=2048, mxu_dtype=jnp.bfloat16,
                 x_buffers=2, vmem_budget_bytes=24 * 1024 * 1024):
    """FwFM interaction scores.

    x: [B, F, D] field embeddings. Padded fields MUST be exactly zero
       (precondition; a bf16 cast preserves zeros).
    r: [F, F]    field-pair weights; only the strict upper triangle is used.
    tile_b:      batch-tile size; rounded to a multiple of 128, clamped so the
                 grid has >= 2 steps when B >= 256 (v7x dual-TensorCore), and
                 shrunk to fit `vmem_budget_bytes`.
    mxu_dtype:   MXU input dtype, default bfloat16 on every generation (v5e
                 included -- its MXU takes bf16; accumulation stays f32).
                 Pass None to keep x.dtype. Prefer handing x in already in
                 bf16 to skip the wrapper cast entirely.
    x_buffers:   pipeline depth for the x tiles (3 can hide DMA jitter on v7x).
    Returns: [B] float32, y[b] = sum_{i<j} r[i,j] * <x[b,i], x[b,j]>.
    """
    b, f, d = x.shape
    fd = f * d
    if fd > 2048:
        raise NotImplementedError(
            "kron(triu(r,1), I_D) weight is (F*D)^2 elements and inflates FLOPs "
            "by D; use a field-axis / block-diagonal formulation for F*D > 2048.")

    compute_dtype = jnp.dtype(x.dtype) if mxu_dtype is None else jnp.dtype(mxu_dtype)
    itemsize = compute_dtype.itemsize

    # Fold the strict-upper-triangular pair mask into a [F*D, F*D] weight matrix:
    # sum_fd ((x_b @ W) * x_b) == sum_{i<j} r[i,j] <x[b,i], x[b,j]>.
    r_upper = jnp.triu(r.astype(jnp.float32), k=1)
    w = jnp.kron(r_upper, jnp.eye(d, dtype=jnp.float32)).T.astype(compute_dtype)

    x2 = x.reshape(b, fd)                      # free reshape; F*D lands on lanes
    if x2.dtype != compute_dtype:
        x2 = x2.astype(compute_dtype)          # fused into input DMA when possible

    # --- batch tile selection -------------------------------------------------
    b_ceil = pl.cdiv(b, 128) * 128
    tile_b = max(128, (min(tile_b, b_ceil) // 128) * 128)
    if b >= 256:
        # Keep >= 2 grid steps so dimension_semantics=("parallel",) actually
        # shards batch tiles across both v7x TensorCores.
        half = ((b + 1) // 2 + 127) // 128 * 128
        tile_b = min(tile_b, max(128, half))

    def _vmem_bytes(tb):
        return (x_buffers * tb * fd * itemsize   # pipelined x tiles
                + fd * fd * itemsize             # resident W
                + 2 * tb * 4)                    # double-buffered f32 out tile

    while tile_b > 128 and _vmem_bytes(tile_b) > vmem_budget_bytes:
        tile_b = max(128, ((tile_b // 2) // 128) * 128)

    grid_b = pl.cdiv(b, tile_b)                  # ragged last tile: no jnp.pad

    # --- specs ------------------------------------------------------------------
    if x_buffers == 2:
        x_spec = pl.BlockSpec((tile_b, fd), lambda i: (i, 0))
    else:
        x_spec = pl.BlockSpec((tile_b, fd), lambda i: (i, 0),
                              pipeline_mode=pl.Buffered(x_buffers))
    w_spec = pl.BlockSpec((fd, fd), lambda i: (0, 0))       # W resident across steps
    o_spec = pl.BlockSpec((1, tile_b), lambda i: (0, i))     # lane-dense output

    cost = pl.CostEstimate(
        flops=int(2 * b * fd * fd + 2 * b * fd),
        transcendentals=0,
        bytes_accessed=int(b * fd * itemsize + fd * fd * itemsize + b * 4),
    )

    out = pl.pallas_call(
        fwfm_kernel,
        out_shape=jax.ShapeDtypeStruct((1, b), jnp.float32),
        grid_spec=pltpu.PrefetchScalarGridSpec(
            num_scalar_prefetch=0,
            grid=(grid_b,),
            in_specs=[x_spec, w_spec],
            out_specs=o_spec,
        ),
        compiler_params=pltpu.CompilerParams(
            dimension_semantics=("parallel",),        # shard batch tiles across TCs
            allow_input_fusion=[True, True],          # fuse cast/reshape into input DMA
        ),
        cost_estimate=cost,
    )(x2, w)
    return out[0]


def fwfm_reference(x, r):
    s = jnp.einsum("bfd,bgd->bfg", x, x, precision=jax.lax.Precision.HIGHEST)
    nf = x.shape[1]
    upper = jnp.triu(jnp.ones((nf, nf), dtype=bool), k=1)
    return jnp.sum(jnp.where(upper[None], s * r[None], 0.0), axis=(1, 2))


if __name__ == "__main__":
    batch = 200        # exercises ragged (non-multiple-of-128) batch handling
    num_fields = 8     # sparse feature fields (incl. padding slots)
    emb_dim = 32       # embedding dimension

    key = jax.random.PRNGKey(0)
    kx, kr, kl = jax.random.split(key, 3)

    # Synthetic per-sample embeddings; zero out the padded fields (>= length).
    x = jax.random.normal(kx, (batch, num_fields, emb_dim), dtype=jnp.float32)
    lengths = jax.random.randint(kl, (batch,), 1, num_fields + 1)
    field_ids = jnp.arange(num_fields)[None, :, None]
    x = jnp.where(field_ids < lengths[:, None, None], x, 0.0)

    # Xavier-uniform-style field-pair weights r[i, j].
    limit = (6.0 / (num_fields + num_fields)) ** 0.5
    r = jax.random.uniform(kr, (num_fields, num_fields), dtype=jnp.float32,
                           minval=-limit, maxval=limit)

    # Default bf16 MXU path (single ragged tile): compare against a reference
    # that sees the same bf16 rounding of x / r (both accumulate in f32).
    out_bf16 = jax.block_until_ready(fwfm_forward(x, r))
    x_bf = x.astype(jnp.bfloat16).astype(jnp.float32)
    r_bf = r.astype(jnp.bfloat16).astype(jnp.float32)
    ref_bf = fwfm_reference(x_bf, r_bf)
    assert out_bf16.shape == (batch,), out_bf16.shape
    assert jnp.allclose(out_bf16, ref_bf, rtol=2e-3, atol=2e-3), (out_bf16[:4], ref_bf[:4])

    # Full-f32 path, 2-step grid with a ragged last tile, tight tolerance.
    out_f32 = jax.block_until_ready(fwfm_forward(x, r, mxu_dtype=None, tile_b=128))
    ref = fwfm_reference(x, r)
    assert out_f32.shape == (batch,), out_f32.shape
    assert jnp.allclose(out_f32, ref, rtol=1e-4, atol=1e-4), (out_f32[:4], ref[:4])

    print("KERNEL_OK")
</pallas_src>

<mosaic_0001>
module attributes {stable_mosaic.version = 11 : i64} {
  func.func @fwfm_kernel(%arg0: i32, %arg1: memref<256x256xbf16, #tpu.memory_space<vmem>>, %arg2: memref<256x256xbf16, #tpu.memory_space<vmem>>, %arg3: memref<1x256xf32, #tpu.memory_space<vmem>>) attributes {dimension_semantics = [#tpu.dimension_semantics<parallel>], iteration_bounds = array<i64: 1>, scalar_prefetch = 0 : i64, scratch_operands = 0 : i64, tpu.core_type = #tpu.core_type<tc>, window_params = [{transform_indices = @transform_0, window_bounds = array<i64: 256, 256>}, {pipeline_mode = #tpu.pipeline_mode<synchronous>, transform_indices = @transform_1, window_bounds = array<i64: 256, 256>}, {transform_indices = @transform_2, window_bounds = array<i64: 1, 256>}]} {
    %c0 = arith.constant 0 : index
    %c0_0 = arith.constant 0 : index
    %0 = vector.load %arg1[%c0, %c0_0] : memref<256x256xbf16, #tpu.memory_space<vmem>>, vector<256x256xbf16>
    %c0_1 = arith.constant 0 : index
    %c0_2 = arith.constant 0 : index
    %1 = vector.load %arg2[%c0_1, %c0_2] : memref<256x256xbf16, #tpu.memory_space<vmem>>, vector<256x256xbf16>
    %cst = arith.constant dense<0.000000e+00> : vector<256x256xf32>
    %2 = tpu.matmul %0, %1, %cst {dimension_numbers = #tpu.dot_dimension_numbers<[1], [0], [0], [1], [0, 0, 1, 1], [], []>} : vector<256x256xbf16>, vector<256x256xbf16>, vector<256x256xf32> -> vector<256x256xf32>
    %3 = arith.extf %0 : vector<256x256xbf16> to vector<256x256xf32>
    %4 = arith.mulf %2, %3 : vector<256x256xf32>
    %cst_3 = arith.constant dense<0.000000e+00> : vector<256xf32>
    %5 = vector.multi_reduction <add>, %4, %cst_3 [1] : vector<256x256xf32> to vector<256xf32>
    %c0_4 = arith.constant 0 : index
    %c0_5 = arith.constant 0 : index
    %6 = vector.load %arg3[%c0_4, %c0_5] : memref<1x256xf32, #tpu.memory_space<vmem>>, vector<1x256xf32>
    %7 = vector.shape_cast %6 : vector<1x256xf32> to vector<256xf32>
    %8 = vector.shape_cast %5 : vector<256xf32> to vector<1x256xf32>
    tpu.vector_store %arg3[%c0_4, %c0_5], %8 {strides = array<i32>} : memref<1x256xf32, #tpu.memory_space<vmem>>, vector<1x256xf32>,
    return
  }
  func.func @transform_0(%arg0: i32) -> (i32, i32) {
    %c0_i32 = arith.constant 0 : i32
    %c0_i32_0 = arith.constant 0 : i32
    return %arg0, %c0_i32 : i32, i32
  }
  func.func @transform_1(%arg0: i32) -> (i32, i32) {
    %c0_i32 = arith.constant 0 : i32
    %c0_i32_0 = arith.constant 0 : i32
    %c0_i32_1 = arith.constant 0 : i32
    return %c0_i32, %c0_i32_0 : i32, i32
  }
  func.func @transform_2(%arg0: i32) -> (i32, i32) {
    %c0_i32 = arith.constant 0 : i32
    %c0_i32_0 = arith.constant 0 : i32
    return %c0_i32, %arg0 : i32, i32
  }
}

</mosaic_0001>

<llo_original>
// kernel: tpu_custom_call.1
$region0: #{tpu_custom_call.1}
  #allocation0 [shape = 'u32[]', space=smem, size = 0x4, offset = 0x4, fixed_abs, tag = 'smem constant byte address 0x4 - core index']
  #allocation1 [shape = 'u32[144,128]{1,0:T(1,128)}', space=vmem, size = 0x12000, scoped, tag = 'internal scratch']
  %s0 = inlined_call_operand.hbm [shape: bf16[200,256], index: 0, kind: input, shape index: {}]
  %s1 = inlined_call_operand.hbm [shape: bf16[256,256], index: 1, kind: input, shape index: {}]
  %s2 = inlined_call_operand.hbm [shape: f32[1,200], index: 2, kind: output, shape index: {}]
  %s3 = sld [smem:[#allocation0]]
  $region26: #{tpu_custom_call.1} parent=0
    _
  %s5 = ssub.s32 1, %s3
  %s6 = scalar_select 0, %s5, %s3
  $region1: #{tpu_custom_call.1} parent=0
    #allocation2 [shape = 'u8[131072]{0}', space=vmem, size = 0x20000, scoped, tag = 'input window, operand 0, single buffered']
    #allocation3 [shape = 's32[1]{0}', space=sflag, size = 0x4, scoped, tag = 'scoped memory for tpu_custom_call.1']
    #allocation4 [shape = 's32[1]{0}', space=sflag, size = 0x4, scoped, tag = 'scoped memory for tpu_custom_call.1']
    #allocation5 [shape = 'u8[131072]{0}', space=vmem, size = 0x20000, scoped, tag = 'input window, operand 1, single buffered']
    #allocation6 [shape = 's32[1]{0}', space=sflag, size = 0x4, scoped, tag = 'scoped memory for tpu_custom_call.1']
    #allocation7 [shape = 'u8[1024]{0}', space=vmem, size = 0x400, scoped, tag = 'output window, operand 0, single buffered']
    %7 = vsyncpa [#allocation3], 0
    %8 = vsyncpa [#allocation6], 0
    %9 = vsyncpa [#allocation4], 0
    // Predicated region
    $region2: #{tpu_custom_call.1} parent=1 // pred_check
      _
    $region3: #{tpu_custom_call.1} parent=1 // pred_check_branch
      %11 = sbr.rel (0) target = $region5
    $region4: #{tpu_custom_call.1} parent=1 // pred_region
      %s13 = ssub.s32 4096, 3200
      %14 = vsyncadd [#allocation3], %s13
      %s15 = sshll.u32 [#allocation2], 4
      %s16 = int_to_ptr.vmem [resolvable:$true] %s15
      %21 = dma.hbm_to_vmem [thread:$0]  %s0, 3200, %s16, [#allocation3], 128, 128, 8
    $region5: #{tpu_custom_call.1} parent=1 // pred_fallthru
      _
    // Predicated region
    $region6: #{tpu_custom_call.1} parent=1 // pred_check
      _
    $region7: #{tpu_custom_call.1} parent=1 // pred_check_branch
      %23 = sbr.rel (0) target = $region9
    $region8: #{tpu_custom_call.1} parent=1 // pred_region
      %s25 = ssub.s32 4096, 4096
      %26 = vsyncadd [#allocation6], %s25
      %s27 = sshll.u32 [#allocation5], 4
      %s28 = int_to_ptr.vmem [resolvable:$true] %s27
      %33 = dma.hbm_to_vmem [thread:$0]  %s1, 4096, %s28, [#allocation6], 128, 128, 8
    $region9: #{tpu_custom_call.1} parent=1 // pred_fallthru
      _
    // Predicated region
    $region10: #{tpu_custom_call.1} parent=1 // pred_check
      _
    $region11: #{tpu_custom_call.1} parent=1 // pred_check_branch
      %35 = sbr.rel (0) target = $region13
    $region12: #{tpu_custom_call.1} parent=1 // pred_region
      %36 = dma.done [#allocation3], 4096
    $region13: #{tpu_custom_call.1} parent=1 // pred_fallthru
      _
    // Predicated region
    $region14: #{tpu_custom_call.1} parent=1 // pred_check
      _
    $region15: #{tpu_custom_call.1} parent=1 // pred_check_branch
      %38 = sbr.rel (0) target = $region17
    $region16: #{tpu_custom_call.1} parent=1 // pred_region
      %39 = dma.done [#allocation6], 4096
    $region17: #{tpu_custom_call.1} parent=1 // pred_fallthru
      _
    %v40 = vld [vmem:[#allocation2] sm:$0xff]
    %v41 = vld [vmem:[#allocation2 + $0x8] sm:$0xff]
    %v42 = vld [vmem:[#allocation2 + $0x10] sm:$0xff]
    %v43 = vld [vmem:[#allocation2 + $0x18] sm:$0xff]
    %v44 = vld [vmem:[#allocation2 + $0x20] sm:$0xff]
    %v45 = vld [vmem:[#allocation2 + $0x28] sm:$0xff]
    %v46 = vld [vmem:[#allocation2 + $0x30] sm:$0xff]
    %v47 = vld [vmem:[#allocation2 + $0x38] sm:$0xff]
    %v48 = vld [vmem:[#allocation2 + $0x40] sm:$0xff]
    %v49 = vld [vmem:[#allocation2 + $0x48] sm:$0xff]
    %v50 = vld [vmem:[#allocation2 + $0x50] sm:$0xff]
    %v51 = vld [vmem:[#allocation2 + $0x58] sm:$0xff]
    %v52 = vld [vmem:[#allocation2 + $0x60] sm:$0xff]
    %v53 = vld [vmem:[#allocation2 + $0x68] sm:$0xff]
    %v54 = vld [vmem:[#allocation2 + $0x70] sm:$0xff]
    %v55 = vld [vmem:[#allocation2 + $0x78] sm:$0xff]
    %v56 = vld [vmem:[#allocation2 + $0x80] sm:$0xff]
    %v57 = vld [vmem:[#allocation2 + $0x88] sm:$0xff]
    %v58 = vld [vmem:[#allocation2 + $0x90] sm:$0xff]
    %v59 = vld [vmem:[#allocation2 + $0x98] sm:$0xff]
    %v60 = vld [vmem:[#allocation2 + $0xa0] sm:$0xff]
    %v61 = vld [vmem:[#allocation2 + $0xa8] sm:$0xff]
    %v62 = vld [vmem:[#allocation2 + $0xb0] sm:$0xff]
    %v63 = vld [vmem:[#allocation2 + $0xb8] sm:$0xff]
    %v64 = vld [vmem:[#allocation2 + $0xc0] sm:$0xff]
    %v65 = vld [vmem:[#allocation2 + $0xc8] sm:$0xff]
    %v66 = vld [vmem:[#allocation2 + $0xd0] sm:$0xff]
    %v67 = vld [vmem:[#allocation2 + $0xd8] sm:$0xff]
    %v68 = vld [vmem:[#allocation2 + $0xe0] sm:$0xff]
    %v69 = vld [vmem:[#allocation2 + $0xe8] sm:$0xff]
    %v70 = vld [vmem:[#allocation2 + $0xf0] sm:$0xff]
    %v71 = vld [vmem:[#allocation2 + $0xf8] sm:$0xff]
    %v72 = vld [vmem:[#allocation5] sm:$0xff]
    %v73 = vld [vmem:[#allocation5 + $0x8] sm:$0xff]
    %v74 = vld [vmem:[#allocation5 + $0x10] sm:$0xff]
    %v75 = vld [vmem:[#allocation5 + $0x18] sm:$0xff]
    %v76 = vld [vmem:[#allocation5 + $0x20] sm:$0xff]
    %v77 = vld [vmem:[#allocation5 + $0x28] sm:$0xff]
    %v78 = vld [vmem:[#allocation5 + $0x30] sm:$0xff]
    %v79 = vld [vmem:[#allocation5 + $0x38] sm:$0xff]
    %v80 = vld [vmem:[#allocation5 + $0x40] sm:$0xff]
    %v81 = vld [vmem:[#allocation5 + $0x48] sm:$0xff]
    %v82 = vld [vmem:[#allocation5 + $0x50] sm:$0xff]
    %v83 = vld [vmem:[#allocation5 + $0x58] sm:$0xff]
    %v84 = vld [vmem:[#allocation5 + $0x60] sm:$0xff]
    %v85 = vld [vmem:[#allocation5 + $0x68] sm:$0xff]
    %v86 = vld [vmem:[#allocation5 + $0x70] sm:$0xff]
    %v87 = vld [vmem:[#allocation5 + $0x78] sm:$0xff]
    %v88 = vld [vmem:[#allocation5 + $0x80] sm:$0xff]
    %v89 = vld [vmem:[#allocation5 + $0x88] sm:$0xff]
    %v90 = vld [vmem:[#allocation5 + $0x90] sm:$0xff]
    %v91 = vld [vmem:[#allocation5 + $0x98] sm:$0xff]
    %v92 = vld [vmem:[#allocation5 + $0xa0] sm:$0xff]
    %v93 = vld [vmem:[#allocation5 + $0xa8] sm:$0xff]
    %v94 = vld [vmem:[#allocation5 + $0xb0] sm:$0xff]
    %v95 = vld [vmem:[#allocation5 + $0xb8] sm:$0xff]
    %v96 = vld [vmem:[#allocation5 + $0xc0] sm:$0xff]
    %v97 = vld [vmem:[#allocation5 + $0xc8] sm:$0xff]
    %v98 = vld [vmem:[#allocation5 + $0xd0] sm:$0xff]
    %v99 = vld [vmem:[#allocation5 + $0xd8] sm:$0xff]
    %v100 = vld [vmem:[#allocation5 + $0xe0] sm:$0xff]
    %v101 = vld [vmem:[#allocation5 + $0xe8] sm:$0xff]
    %v102 = vld [vmem:[#allocation5 + $0xf0] sm:$0xff]
    %v103 = vld [vmem:[#allocation5 + $0xf8] sm:$0xff]
    %v136 = vunpack.c.l.b16 %v40
    %v137 = vunpack.c.h.b16 %v40
    %v138 = vunpack.c.l.b16 %v41
    %v139 = vunpack.c.h.b16 %v41
    %v140 = vunpack.c.l.b16 %v42
    %v141 = vunpack.c.h.b16 %v42
    %v142 = vunpack.c.l.b16 %v43
    %v143 = vunpack.c.h.b16 %v43
    %v144 = vunpack.c.l.b16 %v44
    %v145 = vunpack.c.h.b16 %v44
    %v146 = vunpack.c.l.b16 %v45
    %v147 = vunpack.c.h.b16 %v45
    %v148 = vunpack.c.l.b16 %v46
    %v149 = vunpack.c.h.b16 %v46
    %v150 = vunpack.c.l.b16 %v47
    %v151 = vunpack.c.h.b16 %v47
    %v152 = vunpack.c.l.b16 %v48
    %v153 = vunpack.c.h.b16 %v48
    %v154 = vunpack.c.l.b16 %v49
    %v155 = vunpack.c.h.b16 %v49
    %v156 = vunpack.c.l.b16 %v50
    %v157 = vunpack.c.h.b16 %v50
    %v158 = vunpack.c.l.b16 %v51
    %v159 = vunpack.c.h.b16 %v51
    %v160 = vunpack.c.l.b16 %v52
    %v161 = vunpack.c.h.b16 %v52
    %v162 = vunpack.c.l.b16 %v53
    %v163 = vunpack.c.h.b16 %v53
    %v164 = vunpack.c.l.b16 %v54
    %v165 = vunpack.c.h.b16 %v54
    %v166 = vunpack.c.l.b16 %v55
    %v167 = vunpack.c.h.b16 %v55
    %v168 = vunpack.c.l.b16 %v56
    %v169 = vunpack.c.h.b16 %v56
    %v170 = vunpack.c.l.b16 %v57
    %v171 = vunpack.c.h.b16 %v57
    %v172 = vunpack.c.l.b16 %v58
    %v173 = vunpack.c.h.b16 %v58
    %v174 = vunpack.c.l.b16 %v59
    %v175 = vunpack.c.h.b16 %v59
    %v176 = vunpack.c.l.b16 %v60
    %v177 = vunpack.c.h.b16 %v60
    %v178 = vunpack.c.l.b16 %v61
    %v179 = vunpack.c.h.b16 %v61
    %v180 = vunpack.c.l.b16 %v62
    %v181 = vunpack.c.h.b16 %v62
    %v182 = vunpack.c.l.b16 %v63
    %v183 = vunpack.c.h.b16 %v63
    %v184 = vunpack.c.l.b16 %v64
    %v185 = vunpack.c.h.b16 %v64
    %v186 = vunpack.c.l.b16 %v65
    %v187 = vunpack.c.h.b16 %v65
    %v188 = vunpack.c.l.b16 %v66
    %v189 = vunpack.c.h.b16 %v66
    %v190 = vunpack.c.l.b16 %v67
    %v191 = vunpack.c.h.b16 %v67
    %v192 = vunpack.c.l.b16 %v68
    %v193 = vunpack.c.h.b16 %v68
    %v194 = vunpack.c.l.b16 %v69
    %v195 = vunpack.c.h.b16 %v69
    %v196 = vunpack.c.l.b16 %v70
    %v197 = vunpack.c.h.b16 %v70
    %v198 = vunpack.c.l.b16 %v71
    %v199 = vunpack.c.h.b16 %v71
    %v200 = vpack.c.b16 %v138, %v136
    %v201 = vpack.c.b16 %v139, %v137
    %v202 = vpack.c.b16 %v142, %v140
    %v203 = vpack.c.b16 %v143, %v141
    %v204 = vpack.c.b16 %v146, %v144
    %v205 = vpack.c.b16 %v147, %v145
    %v206 = vpack.c.b16 %v150, %v148
    %v207 = vpack.c.b16 %v151, %v149
    %v208 = vpack.c.b16 %v154, %v152
    %v209 = vpack.c.b16 %v155, %v153
    %v210 = vpack.c.b16 %v158, %v156
    %v211 = vpack.c.b16 %v159, %v157
    %v212 = vpack.c.b16 %v162, %v160
    %v213 = vpack.c.b16 %v163, %v161
    %v214 = vpack.c.b16 %v166, %v164
    %v215 = vpack.c.b16 %v167, %v165
    %v216 = vpack.c.b16 %v170, %v168
    %v217 = vpack.c.b16 %v171, %v169
    %v218 = vpack.c.b16 %v174, %v172
    %v219 = vpack.c.b16 %v175, %v173
    %v220 = vpack.c.b16 %v178, %v176
    %v221 = vpack.c.b16 %v179, %v177
    %v222 = vpack.c.b16 %v182, %v180
    %v223 = vpack.c.b16 %v183, %v181
    %v224 = vpack.c.b16 %v186, %v184
    %v225 = vpack.c.b16 %v187, %v185
    %v226 = vpack.c.b16 %v190, %v188
    %v227 = vpack.c.b16 %v191, %v189
    %v228 = vpack.c.b16 %v194, %v192
    %v229 = vpack.c.b16 %v195, %v193
    %v230 = vpack.c.b16 %v198, %v196
    %v231 = vpack.c.b16 %v199, %v197
    %v296 = vunpack.c.l.b16 %v72
    %v297 = vunpack.c.h.b16 %v72
    %v298 = vunpack.c.l.b16 %v73
    %v299 = vunpack.c.h.b16 %v73
    %v300 = vunpack.c.l.b16 %v74
    %v301 = vunpack.c.h.b16 %v74
    %v302 = vunpack.c.l.b16 %v75
    %v303 = vunpack.c.h.b16 %v75
    %v304 = vunpack.c.l.b16 %v76
    %v305 = vunpack.c.h.b16 %v76
    %v306 = vunpack.c.l.b16 %v77
    %v307 = vunpack.c.h.b16 %v77
    %v308 = vunpack.c.l.b16 %v78
    %v309 = vunpack.c.h.b16 %v78
    %v310 = vunpack.c.l.b16 %v79
    %v311 = vunpack.c.h.b16 %v79
    %v312 = vunpack.c.l.b16 %v80
    %v313 = vunpack.c.h.b16 %v80
    %v314 = vunpack.c.l.b16 %v81
    %v315 = vunpack.c.h.b16 %v81
    %v316 = vunpack.c.l.b16 %v82
    %v317 = vunpack.c.h.b16 %v82
    %v318 = vunpack.c.l.b16 %v83
    %v319 = vunpack.c.h.b16 %v83
    %v320 = vunpack.c.l.b16 %v84
    %v321 = vunpack.c.h.b16 %v84
    %v322 = vunpack.c.l.b16 %v85
    %v323 = vunpack.c.h.b16 %v85
    %v324 = vunpack.c.l.b16 %v86
    %v325 = vunpack.c.h.b16 %v86
    %v326 = vunpack.c.l.b16 %v87
    %v327 = vunpack.c.h.b16 %v87
    %v328 = vunpack.c.l.b16 %v88
    %v329 = vunpack.c.h.b16 %v88
    %v330 = vunpack.c.l.b16 %v89
    %v331 = vunpack.c.h.b16 %v89
    %v332 = vunpack.c.l.b16 %v90
    %v333 = vunpack.c.h.b16 %v90
    %v334 = vunpack.c.l.b16 %v91
    %v335 = vunpack.c.h.b16 %v91
    %v336 = vunpack.c.l.b16 %v92
    %v337 = vunpack.c.h.b16 %v92
    %v338 = vunpack.c.l.b16 %v93
    %v339 = vunpack.c.h.b16 %v93
    %v340 = vunpack.c.l.b16 %v94
    %v341 = vunpack.c.h.b16 %v94
    %v342 = vunpack.c.l.b16 %v95
    %v343 = vunpack.c.h.b16 %v95
    %v344 = vunpack.c.l.b16 %v96
    %v345 = vunpack.c.h.b16 %v96
    %v346 = vunpack.c.l.b16 %v97
    %v347 = vunpack.c.h.b16 %v97
    %v348 = vunpack.c.l.b16 %v98
    %v349 = vunpack.c.h.b16 %v98
    %v350 = vunpack.c.l.b16 %v99
    %v351 = vunpack.c.h.b16 %v99
    %v352 = vunpack.c.l.b16 %v100
    %v353 = vunpack.c.h.b16 %v100
    %v354 = vunpack.c.l.b16 %v101
    %v355 = vunpack.c.h.b16 %v101
    %v356 = vunpack.c.l.b16 %v102
    %v357 = vunpack.c.h.b16 %v102
    %v358 = vunpack.c.l.b16 %v103
    %v359 = vunpack.c.h.b16 %v103
    %v360 = vpack.c.b16 %v298, %v296
    %v361 = vpack.c.b16 %v299, %v297
    %v362 = vpack.c.b16 %v302, %v300
    %v363 = vpack.c.b16 %v303, %v301
    %v364 = vpack.c.b16 %v306, %v304
    %v365 = vpack.c.b16 %v307, %v305
    %v366 = vpack.c.b16 %v310, %v308
    %v367 = vpack.c.b16 %v311, %v309
    %v368 = vpack.c.b16 %v314, %v312
    %v369 = vpack.c.b16 %v315, %v313
    %v370 = vpack.c.b16 %v318, %v316
    %v371 = vpack.c.b16 %v319, %v317
    %v372 = vpack.c.b16 %v322, %v320
    %v373 = vpack.c.b16 %v323, %v321
    %v374 = vpack.c.b16 %v326, %v324
    %v375 = vpack.c.b16 %v327, %v325
    %v376 = vpack.c.b16 %v330, %v328
    %v377 = vpack.c.b16 %v331, %v329
    %v378 = vpack.c.b16 %v334, %v332
    %v379 = vpack.c.b16 %v335, %v333
    %v380 = vpack.c.b16 %v338, %v336
    %v381 = vpack.c.b16 %v339, %v337
    %v382 = vpack.c.b16 %v342, %v340
    %v383 = vpack.c.b16 %v343, %v341
    %v384 = vpack.c.b16 %v346, %v344
    %v385 = vpack.c.b16 %v347, %v345
    %v386 = vpack.c.b16 %v350, %v348
    %v387 = vpack.c.b16 %v351, %v349
    %v388 = vpack.c.b16 %v354, %v352
    %v389 = vpack.c.b16 %v355, %v353
    %v390 = vpack.c.b16 %v358, %v356
    %v391 = vpack.c.b16 %v359, %v357
    %424 = vmatprep.subr.bf16.mxu0 %v361
    %425 = vmatpush1.bf16.msra.mxu0 %v360
    %426 = vmatprep.subr.bf16.mxu0 %v363
    %427 = vmatpush1.bf16.msra.mxu0 %v362
    %428 = vmatprep.subr.bf16.mxu0 %v365
    %429 = vmatpush1.bf16.msra.mxu0 %v364
    %430 = vmatprep.subr.bf16.mxu0 %v367
    %431 = vmatpush1.bf16.msra.mxu0 %v366
    %432 = vmatprep.subr.bf16.mxu0 %v369
    %433 = vmatpush1.bf16.msra.mxu0 %v368
    %434 = vmatprep.subr.bf16.mxu0 %v371
    %435 = vmatpush1.bf16.msra.mxu0 %v370
    %436 = vmatprep.subr.bf16.mxu0 %v373
    %437 = vmatpush1.bf16.msra.mxu0 %v372
    %438 = vmatprep.subr.bf16.mxu0 %v375
    %439 = vmatpush1.bf16.msra.mxu0 %v374
    %440 = vmatprep.subr.bf16.mxu0 %v377
    %441 = vmatpush1.bf16.msra.mxu0 %v376
    %442 = vmatprep.subr.bf16.mxu0 %v379
    %443 = vmatpush1.bf16.msra.mxu0 %v378
    %444 = vmatprep.subr.bf16.mxu0 %v381
    %445 = vmatpush1.bf16.msra.mxu0 %v380
    %446 = vmatprep.subr.bf16.mxu0 %v383
    %447 = vmatpush1.bf16.msra.mxu0 %v382
    %448 = vmatprep.subr.bf16.mxu0 %v385
    %449 = vmatpush1.bf16.msra.mxu0 %v384
    %450 = vmatprep.subr.bf16.mxu0 %v387
    %451 = vmatpush1.bf16.msra.mxu0 %v386
    %452 = vmatprep.subr.bf16.mxu0 %v389
    %453 = vmatpush1.bf16.msra.mxu0 %v388
    %454 = vmatprep.subr.bf16.mxu0 %v391
    %455 = vmatpush1.bf16.msra.mxu0 %v390
    %456 = vmatprep.mubr.bf16.mxu0 %v201
    %457 = vmatmul.mubr.bf16.gmra.mrb[0].mxu0 %v200
    %v458 = vpop.f32.mrb[0].mxu0
    %v459 = vadd.f32 0.0, %v458
    %v460 = vpop.f32.mrb[0].mxu0
    %v461 = vadd.f32 0.0, %v460
    %v462 = vpop.f32.mrb[0].mxu0
    %v463 = vadd.f32 0.0, %v462
    %v464 = vpop.f32.mrb[0].mxu0
    %v465 = vadd.f32 0.0, %v464
    %466 = vmatprep.mubr.bf16.mxu0 %v203
    %467 = vmatmul.mubr.bf16.gmra.mrb[0].mxu0 %v202
    %v468 = vpop.f32.mrb[0].mxu0
    %v469 = vadd.f32 0.0, %v468
    %v470 = vpop.f32.mrb[0].mxu0
    %v471 = vadd.f32 0.0, %v470
    %v472 = vpop.f32.mrb[0].mxu0
    %v473 = vadd.f32 0.0, %v472
    %v474 = vpop.f32.mrb[0].mxu0
    %v475 = vadd.f32 0.0, %v474
    %476 = vmatprep.mubr.bf16.mxu0 %v205
    %477 = vmatmul.mubr.bf16.gmra.mrb[0].mxu0 %v204
    %v478 = vpop.f32.mrb[0].mxu0
    %v479 = vadd.f32 0.0, %v478
    %v480 = vpop.f32.mrb[0].mxu0
    %v481 = vadd.f32 0.0, %v480
    %v482 = vpop.f32.mrb[0].mxu0
    %v483 = vadd.f32 0.0, %v482
    %v484 = vpop.f32.mrb[0].mxu0
    %v485 = vadd.f32 0.0, %v484
    %486 = vmatprep.mubr.bf16.mxu0 %v207
    %487 = vmatmul.mubr.bf16.gmra.mrb[0].mxu0 %v206
    %v488 = vpop.f32.mrb[0].mxu0
    %v489 = vadd.f32 0.0, %v488
    %v490 = vpop.f32.mrb[0].mxu0
    %v491 = vadd.f32 0.0, %v490
    %v492 = vpop.f32.mrb[0].mxu0
    %v493 = vadd.f32 0.0, %v492
    %v494 = vpop.f32.mrb[0].mxu0
    %v495 = vadd.f32 0.0, %v494
    %496 = vmatprep.mubr.bf16.mxu0 %v209
    %497 = vmatmul.mubr.bf16.gmra.mrb[0].mxu0 %v208
    %v498 = vpop.f32.mrb[0].mxu0
    %v499 = vadd.f32 0.0, %v498
    %v500 = vpop.f32.mrb[0].mxu0
    %v501 = vadd.f32 0.0, %v500
    %v502 = vpop.f32.mrb[0].mxu0
    %v503 = vadd.f32 0.0, %v502
    %v504 = vpop.f32.mrb[0].mxu0
    %v505 = vadd.f32 0.0, %v504
    %506 = vmatprep.mubr.bf16.mxu0 %v211
    %507 = vmatmul.mubr.bf16.gmra.mrb[0].mxu0 %v210
    %v508 = vpop.f32.mrb[0].mxu0
    %v509 = vadd.f32 0.0, %v508
    %v510 = vpop.f32.mrb[0].mxu0
    %v511 = vadd.f32 0.0, %v510
    %v512 = vpop.f32.mrb[0].mxu0
    %v513 = vadd.f32 0.0, %v512
    %v514 = vpop.f32.mrb[0].mxu0
    %v515 = vadd.f32 0.0, %v514
    %516 = vmatprep.mubr.bf16.mxu0 %v213
    %517 = vmatmul.mubr.bf16.gmra.mrb[0].mxu0 %v212
    %v518 = vpop.f32.mrb[0].mxu0
    %v519 = vadd.f32 0.0, %v518
    %v520 = vpop.f32.mrb[0].mxu0
    %v521 = vadd.f32 0.0, %v520
    %v522 = vpop.f32.mrb[0].mxu0
    %v523 = vadd.f32 0.0, %v522
    %v524 = vpop.f32.mrb[0].mxu0
    %v525 = vadd.f32 0.0, %v524
    %526 = vmatprep.mubr.bf16.mxu0 %v215
    %527 = vmatmul.mubr.bf16.gmra.mrb[0].mxu0 %v214
    %v528 = vpop.f32.mrb[0].mxu0
    %v529 = vadd.f32 0.0, %v528
    %v530 = vpop.f32.mrb[0].mxu0
    %v531 = vadd.f32 0.0, %v530
    %v532 = vpop.f32.mrb[0].mxu0
    %v533 = vadd.f32 0.0, %v532
    %v534 = vpop.f32.mrb[0].mxu0
    %v535 = vadd.f32 0.0, %v534
    %536 = vmatprep.mubr.bf16.mxu0 %v217
    %537 = vmatmul.mubr.bf16.gmra.mrb[0].mxu0 %v216
    %v538 = vpop.f32.mrb[0].mxu0
    %v539 = vadd.f32 0.0, %v538
    %v540 = vpop.f32.mrb[0].mxu0
    %v541 = vadd.f32 0.0, %v540
    %v542 = vpop.f32.mrb[0].mxu0
    %v543 = vadd.f32 0.0, %v542
    %v544 = vpop.f32.mrb[0].mxu0
    %v545 = vadd.f32 0.0, %v544
    %546 = vmatprep.mubr.bf16.mxu0 %v219
    %547 = vmatmul.mubr.bf16.gmra.mrb[0].mxu0 %v218
    %v548 = vpop.f32.mrb[0].mxu0
    %v549 = vadd.f32 0.0, %v548
    %v550 = vpop.f32.mrb[0].mxu0
    %v551 = vadd.f32 0.0, %v550
    %v552 = vpop.f32.mrb[0].mxu0
    %v553 = vadd.f32 0.0, %v552
    %v554 = vpop.f32.mrb[0].mxu0
    %v555 = vadd.f32 0.0, %v554
    %556 = vmatprep.mubr.bf16.mxu0 %v221
    %557 = vmatmul.mubr.bf16.gmra.mrb[0].mxu0 %v220
    %v558 = vpop.f32.mrb[0].mxu0
    %v559 = vadd.f32 0.0, %v558
    %v560 = vpop.f32.mrb[0].mxu0
    %v561 = vadd.f32 0.0, %v560
    %v562 = vpop.f32.mrb[0].mxu0
    %v563 = vadd.f32 0.0, %v562
    %v564 = vpop.f32.mrb[0].mxu0
    %v565 = vadd.f32 0.0, %v564
    %566 = vmatprep.mubr.bf16.mxu0 %v223
    %567 = vmatmul.mubr.bf16.gmra.mrb[0].mxu0 %v222
    %v568 = vpop.f32.mrb[0].mxu0
    %v569 = vadd.f32 0.0, %v568
    %v570 = vpop.f32.mrb[0].mxu0
    %v571 = vadd.f32 0.0, %v570
    %v572 = vpop.f32.mrb[0].mxu0
    %v573 = vadd.f32 0.0, %v572
    %v574 = vpop.f32.mrb[0].mxu0
    %v575 = vadd.f32 0.0, %v574
    %576 = vmatprep.mubr.bf16.mxu0 %v225
    %577 = vmatmul.mubr.bf16.gmra.mrb[0].mxu0 %v224
    %v578 = vpop.f32.mrb[0].mxu0
    %v579 = vadd.f32 0.0, %v578
    %v580 = vpop.f32.mrb[0].mxu0
    %v581 = vadd.f32 0.0, %v580
    %v582 = vpop.f32.mrb[0].mxu0
    %v583 = vadd.f32 0.0, %v582
    %v584 = vpop.f32.mrb[0].mxu0
    %v585 = vadd.f32 0.0, %v584
    %586 = vmatprep.mubr.bf16.mxu0 %v227
    %587 = vmatmul.mubr.bf16.gmra.mrb[0].mxu0 %v226
    %v588 = vpop.f32.mrb[0].mxu0
    %v589 = vadd.f32 0.0, %v588
    %v590 = vpop.f32.mrb[0].mxu0
    %v591 = vadd.f32 0.0, %v590
    %v592 = vpop.f32.mrb[0].mxu0
    %v593 = vadd.f32 0.0, %v592
    %v594 = vpop.f32.mrb[0].mxu0
    %v595 = vadd.f32 0.0, %v594
    %596 = vmatprep.mubr.bf16.mxu0 %v229
    %597 = vmatmul.mubr.bf16.gmra.mrb[0].mxu0 %v228
    %v598 = vpop.f32.mrb[0].mxu0
    %v599 = vadd.f32 0.0, %v598
    %v600 = vpop.f32.mrb[0].mxu0
    %v601 = vadd.f32 0.0, %v600
    %v602 = vpop.f32.mrb[0].mxu0
    %v603 = vadd.f32 0.0, %v602
    %v604 = vpop.f32.mrb[0].mxu0
    %v605 = vadd.f32 0.0, %v604
    %606 = vmatprep.mubr.bf16.mxu0 %v231
    %607 = vmatmul.mubr.bf16.gmra.mrb[0].mxu0 %v230
    %v608 = vpop.f32.mrb[0].mxu0
    %v609 = vadd.f32 0.0, %v608
    %v610 = vpop.f32.mrb[0].mxu0
    %v611 = vadd.f32 0.0, %v610
    %v612 = vpop.f32.mrb[0].mxu0
    %v613 = vadd.f32 0.0, %v612
    %v614 = vpop.f32.mrb[0].mxu0
    %v615 = vadd.f32 0.0, %v614
    %616 = vdwg.mxu0
    %v617 = vunpack.c.l.bf16 %v40
    %v618 = vunpack.c.h.bf16 %v40
    %v619 = vunpack.c.l.bf16 %v41
    %v620 = vunpack.c.h.bf16 %v41
    %v621 = vunpack.c.l.bf16 %v42
    %v622 = vunpack.c.h.bf16 %v42
    %v623 = vunpack.c.l.bf16 %v43
    %v624 = vunpack.c.h.bf16 %v43
    %v625 = vunpack.c.l.bf16 %v44
    %v626 = vunpack.c.h.bf16 %v44
    %v627 = vunpack.c.l.bf16 %v45
    %v628 = vunpack.c.h.bf16 %v45
    %v629 = vunpack.c.l.bf16 %v46
    %v630 = vunpack.c.h.bf16 %v46
    %v631 = vunpack.c.l.bf16 %v47
    %v632 = vunpack.c.h.bf16 %v47
    %v633 = vunpack.c.l.bf16 %v48
    %v634 = vunpack.c.h.bf16 %v48
    %v635 = vunpack.c.l.bf16 %v49
    %v636 = vunpack.c.h.bf16 %v49
    %v637 = vunpack.c.l.bf16 %v50
    %v638 = vunpack.c.h.bf16 %v50
    %v639 = vunpack.c.l.bf16 %v51
    %v640 = vunpack.c.h.bf16 %v51
    %v641 = vunpack.c.l.bf16 %v52
    %v642 = vunpack.c.h.bf16 %v52
    %v643 = vunpack.c.l.bf16 %v53
    %v644 = vunpack.c.h.bf16 %v53
    %v645 = vunpack.c.l.bf16 %v54
    %v646 = vunpack.c.h.bf16 %v54
    %v647 = vunpack.c.l.bf16 %v55
    %v648 = vunpack.c.h.bf16 %v55
    %v649 = vunpack.c.l.bf16 %v56
    %v650 = vunpack.c.h.bf16 %v56
    %v651 = vunpack.c.l.bf16 %v57
    %v652 = vunpack.c.h.bf16 %v57
    %v653 = vunpack.c.l.bf16 %v58
    %v654 = vunpack.c.h.bf16 %v58
    %v655 = vunpack.c.l.bf16 %v59
    %v656 = vunpack.c.h.bf16 %v59
    %v657 = vunpack.c.l.bf16 %v60
    %v658 = vunpack.c.h.bf16 %v60
    %v659 = vunpack.c.l.bf16 %v61
    %v660 = vunpack.c.h.bf16 %v61
    %v661 = vunpack.c.l.bf16 %v62
    %v662 = vunpack.c.h.bf16 %v62
    %v663 = vunpack.c.l.bf16 %v63
    %v664 = vunpack.c.h.bf16 %v63
    %v665 = vunpack.c.l.bf16 %v64
    %v666 = vunpack.c.h.bf16 %v64
    %v667 = vunpack.c.l.bf16 %v65
    %v668 = vunpack.c.h.bf16 %v65
    %v669 = vunpack.c.l.bf16 %v66
    %v670 = vunpack.c.h.bf16 %v66
    %v671 = vunpack.c.l.bf16 %v67
    %v672 = vunpack.c.h.bf16 %v67
    %v673 = vunpack.c.l.bf16 %v68
    %v674 = vunpack.c.h.bf16 %v68
    %v675 = vunpack.c.l.bf16 %v69
    %v676 = vunpack.c.h.bf16 %v69
    %v677 = vunpack.c.l.bf16 %v70
    %v678 = vunpack.c.h.bf16 %v70
    %v679 = vunpack.c.l.bf16 %v71
    %v680 = vunpack.c.h.bf16 %v71
    %v681 = vmul.f32 %v459, %v617
    %v682 = vmul.f32 %v461, %v618
    %v683 = vmul.f32 %v463, %v619
    %v684 = vmul.f32 %v465, %v620
    %v685 = vmul.f32 %v469, %v621
    %v686 = vmul.f32 %v471, %v622
    %v687 = vmul.f32 %v473, %v623
    %v688 = vmul.f32 %v475, %v624
    %v689 = vmul.f32 %v479, %v625
    %v690 = vmul.f32 %v481, %v626
    %v691 = vmul.f32 %v483, %v627
    %v692 = vmul.f32 %v485, %v628
    %v693 = vmul.f32 %v489, %v629
    %v694 = vmul.f32 %v491, %v630
    %v695 = vmul.f32 %v493, %v631
    %v696 = vmul.f32 %v495, %v632
    %v697 = vmul.f32 %v499, %v633
    %v698 = vmul.f32 %v501, %v634
    %v699 = vmul.f32 %v503, %v635
    %v700 = vmul.f32 %v505, %v636
    %v701 = vmul.f32 %v509, %v637
    %v702 = vmul.f32 %v511, %v638
    %v703 = vmul.f32 %v513, %v639
    %v704 = vmul.f32 %v515, %v640
    %v705 = vmul.f32 %v519, %v641
    %v706 = vmul.f32 %v521, %v642
    %v707 = vmul.f32 %v523, %v643
    %v708 = vmul.f32 %v525, %v644
    %v709 = vmul.f32 %v529, %v645
    %v710 = vmul.f32 %v531, %v646
    %v711 = vmul.f32 %v533, %v647
    %v712 = vmul.f32 %v535, %v648
    %v713 = vmul.f32 %v539, %v649
    %v714 = vmul.f32 %v541, %v650
    %v715 = vmul.f32 %v543, %v651
    %v716 = vmul.f32 %v545, %v652
    %v717 = vmul.f32 %v549, %v653
    %v718 = vmul.f32 %v551, %v654
    %v719 = vmul.f32 %v553, %v655
    %v720 = vmul.f32 %v555, %v656
    %v721 = vmul.f32 %v559, %v657
    %v722 = vmul.f32 %v561, %v658
    %v723 = vmul.f32 %v563, %v659
    %v724 = vmul.f32 %v565, %v660
    %v725 = vmul.f32 %v569, %v661
    %v726 = vmul.f32 %v571, %v662
    %v727 = vmul.f32 %v573, %v663
    %v728 = vmul.f32 %v575, %v664
    %v729 = vmul.f32 %v579, %v665
    %v730 = vmul.f32 %v581, %v666
    %v731 = vmul.f32 %v583, %v667
    %v732 = vmul.f32 %v585, %v668
    %v733 = vmul.f32 %v589, %v669
    %v734 = vmul.f32 %v591, %v670
    %v735 = vmul.f32 %v593, %v671
    %v736 = vmul.f32 %v595, %v672
    %v737 = vmul.f32 %v599, %v673
    %v738 = vmul.f32 %v601, %v674
    %v739 = vmul.f32 %v603, %v675
    %v740 = vmul.f32 %v605, %v676
    %v741 = vmul.f32 %v609, %v677
    %v742 = vmul.f32 %v611, %v678
    %v743 = vmul.f32 %v613, %v679
    %v744 = vmul.f32 %v615, %v680
    %v745 = vadd.f32 %v681, %v682
    %746 = vadd.xlane.f32.xlu0 %v745
    %v747 = vpop.xlane.xlu0 %746
    %v748 = vadd.f32 %v683, %v684
    %749 = vadd.xlane.f32.xlu0 %v748
    %v750 = vpop.xlane.xlu0 %749
    %v751 = vadd.f32 %v685, %v686
    %752 = vadd.xlane.f32.xlu0 %v751
    %v753 = vpop.xlane.xlu0 %752
    %v754 = vadd.f32 %v687, %v688
    %755 = vadd.xlane.f32.xlu0 %v754
    %v756 = vpop.xlane.xlu0 %755
    %v757 = vadd.f32 %v689, %v690
    %758 = vadd.xlane.f32.xlu0 %v757
    %v759 = vpop.xlane.xlu0 %758
    %v760 = vadd.f32 %v691, %v692
    %761 = vadd.xlane.f32.xlu0 %v760
    %v762 = vpop.xlane.xlu0 %761
    %v763 = vadd.f32 %v693, %v694
    %764 = vadd.xlane.f32.xlu0 %v763
    %v765 = vpop.xlane.xlu0 %764
    %v766 = vadd.f32 %v695, %v696
    %767 = vadd.xlane.f32.xlu0 %v766
    %v768 = vpop.xlane.xlu0 %767
    %v769 = vadd.f32 %v697, %v698
    %770 = vadd.xlane.f32.xlu0 %v769
    %v771 = vpop.xlane.xlu0 %770
    %v772 = vadd.f32 %v699, %v700
    %773 = vadd.xlane.f32.xlu0 %v772
    %v774 = vpop.xlane.xlu0 %773
    %v775 = vadd.f32 %v701, %v702
    %776 = vadd.xlane.f32.xlu0 %v775
    %v777 = vpop.xlane.xlu0 %776
    %v778 = vadd.f32 %v703, %v704
    %779 = vadd.xlane.f32.xlu0 %v778
    %v780 = vpop.xlane.xlu0 %779
    %v781 = vadd.f32 %v705, %v706
    %782 = vadd.xlane.f32.xlu0 %v781
    %v783 = vpop.xlane.xlu0 %782
    %v784 = vadd.f32 %v707, %v708
    %785 = vadd.xlane.f32.xlu0 %v784
    %v786 = vpop.xlane.xlu0 %785
    %v787 = vadd.f32 %v709, %v710
    %788 = vadd.xlane.f32.xlu0 %v787
    %v789 = vpop.xlane.xlu0 %788
    %v790 = vadd.f32 %v711, %v712
    %791 = vadd.xlane.f32.xlu0 %v790
    %v792 = vpop.xlane.xlu0 %791
    %v793 = vadd.f32 %v713, %v714
    %794 = vadd.xlane.f32.xlu0 %v793
    %v795 = vpop.xlane.xlu0 %794
    %v796 = vadd.f32 %v715, %v716
    %797 = vadd.xlane.f32.xlu0 %v796
    %v798 = vpop.xlane.xlu0 %797
    %v799 = vadd.f32 %v717, %v718
    %800 = vadd.xlane.f32.xlu0 %v799
    %v801 = vpop.xlane.xlu0 %800
    %v802 = vadd.f32 %v719, %v720
    %803 = vadd.xlane.f32.xlu0 %v802
    %v804 = vpop.xlane.xlu0 %803
    %v805 = vadd.f32 %v721, %v722
    %806 = vadd.xlane.f32.xlu0 %v805
    %v807 = vpop.xlane.xlu0 %806
    %v808 = vadd.f32 %v723, %v724
    %809 = vadd.xlane.f32.xlu0 %v808
    %v810 = vpop.xlane.xlu0 %809
    %v811 = vadd.f32 %v725, %v726
    %812 = vadd.xlane.f32.xlu0 %v811
    %v813 = vpop.xlane.xlu0 %812
    %v814 = vadd.f32 %v727, %v728
    %815 = vadd.xlane.f32.xlu0 %v814
    %v816 = vpop.xlane.xlu0 %815
    %v817 = vadd.f32 %v729, %v730
    %818 = vadd.xlane.f32.xlu0 %v817
    %v819 = vpop.xlane.xlu0 %818
    %v820 = vadd.f32 %v731, %v732
    %821 = vadd.xlane.f32.xlu0 %v820
    %v822 = vpop.xlane.xlu0 %821
    %v823 = vadd.f32 %v733, %v734
    %824 = vadd.xlane.f32.xlu0 %v823
    %v825 = vpop.xlane.xlu0 %824
    %v826 = vadd.f32 %v735, %v736
    %827 = vadd.xlane.f32.xlu0 %v826
    %v828 = vpop.xlane.xlu0 %827
    %v829 = vadd.f32 %v737, %v738
    %830 = vadd.xlane.f32.xlu0 %v829
    %v831 = vpop.xlane.xlu0 %830
    %v832 = vadd.f32 %v739, %v740
    %833 = vadd.xlane.f32.xlu0 %v832
    %v834 = vpop.xlane.xlu0 %833
    %v835 = vadd.f32 %v741, %v742
    %836 = vadd.xlane.f32.xlu0 %v835
    %v837 = vpop.xlane.xlu0 %836
    %v838 = vadd.f32 %v743, %v744
    %839 = vadd.xlane.f32.xlu0 %v838
    %v840 = vpop.xlane.xlu0 %839
    %v873 = vlaneseq
    %v874 = vshrl.u32 %v873, 7
    %v875 = vsub.s32 0, %v874
    %v876 = vrot.slane %v747, %v875
    %v877 = vlaneseq
    %v878 = vshrl.u32 %v877, 7
    %v879 = vsub.s32 1, %v878
    %v880 = vrot.slane %v747, %v879
    %v881 = vlaneseq
    %v882 = vshrl.u32 %v881, 7
    %v883 = vsub.s32 2, %v882
    %v884 = vrot.slane %v747, %v883
    %v885 = vlaneseq
    %v886 = vshrl.u32 %v885, 7
    %v887 = vsub.s32 3, %v886
    %v888 = vrot.slane %v747, %v887
    %v889 = vlaneseq
    %v890 = vshrl.u32 %v889, 7
    %v891 = vsub.s32 4, %v890
    %v892 = vrot.slane %v747, %v891
    %v893 = vlaneseq
    %v894 = vshrl.u32 %v893, 7
    %v895 = vsub.s32 5, %v894
    %v896 = vrot.slane %v747, %v895
    %v897 = vlaneseq
    %v898 = vshrl.u32 %v897, 7
    %v899 = vsub.s32 6, %v898
    %v900 = vrot.slane %v747, %v899
    %v901 = vlaneseq
    %v902 = vshrl.u32 %v901, 7
    %v903 = vsub.s32 7, %v902
    %v904 = vrot.slane %v747, %v903
    %v905 = vlaneseq
    %v906 = vshrl.u32 %v905, 7
    %v907 = vsub.s32 0, %v906
    %v908 = vrot.slane %v750, %v907
    %v909 = vlaneseq
    %v910 = vshrl.u32 %v909, 7
    %v911 = vsub.s32 1, %v910
    %v912 = vrot.slane %v750, %v911
    %v913 = vlaneseq
    %v914 = vshrl.u32 %v913, 7
    %v915 = vsub.s32 2, %v914
    %v916 = vrot.slane %v750, %v915
    %v917 = vlaneseq
    %v918 = vshrl.u32 %v917, 7
    %v919 = vsub.s32 3, %v918
    %v920 = vrot.slane %v750, %v919
    %v921 = vlaneseq
    %v922 = vshrl.u32 %v921, 7
    %v923 = vsub.s32 4, %v922
    %v924 = vrot.slane %v750, %v923
    %v925 = vlaneseq
    %v926 = vshrl.u32 %v925, 7
    %v927 = vsub.s32 5, %v926
    %v928 = vrot.slane %v750, %v927
    %v929 = vlaneseq
    %v930 = vshrl.u32 %v929, 7
    %v931 = vsub.s32 6, %v930
    %v932 = vrot.slane %v750, %v931
    %v933 = vlaneseq
    %v934 = vshrl.u32 %v933, 7
    %v935 = vsub.s32 7, %v934
    %v936 = vrot.slane %v750, %v935
    %v937 = vlaneseq
    %v938 = vshrl.u32 %v937, 7
    %v939 = vsub.s32 0, %v938
    %v940 = vrot.slane %v753, %v939
    %v941 = vlaneseq
    %v942 = vshrl.u32 %v941, 7
    %v943 = vsub.s32 1, %v942
    %v944 = vrot.slane %v753, %v943
    %v945 = vlaneseq
    %v946 = vshrl.u32 %v945, 7
    %v947 = vsub.s32 2, %v946
    %v948 = vrot.slane %v753, %v947
    %v949 = vlaneseq
    %v950 = vshrl.u32 %v949, 7
    %v951 = vsub.s32 3, %v950
    %v952 = vrot.slane %v753, %v951
    %v953 = vlaneseq
    %v954 = vshrl.u32 %v953, 7
    %v955 = vsub.s32 4, %v954
    %v956 = vrot.slane %v753, %v955
    %v957 = vlaneseq
    %v958 = vshrl.u32 %v957, 7
    %v959 = vsub.s32 5, %v958
    %v960 = vrot.slane %v753, %v959
    %v961 = vlaneseq
    %v962 = vshrl.u32 %v961, 7
    %v963 = vsub.s32 6, %v962
    %v964 = vrot.slane %v753, %v963
    %v965 = vlaneseq
    %v966 = vshrl.u32 %v965, 7
    %v967 = vsub.s32 7, %v966
    %v968 = vrot.slane %v753, %v967
    %v969 = vlaneseq
    %v970 = vshrl.u32 %v969, 7
    %v971 = vsub.s32 0, %v970
    %v972 = vrot.slane %v756, %v971
    %v973 = vlaneseq
    %v974 = vshrl.u32 %v973, 7
    %v975 = vsub.s32 1, %v974
    %v976 = vrot.slane %v756, %v975
    %v977 = vlaneseq
    %v978 = vshrl.u32 %v977, 7
    %v979 = vsub.s32 2, %v978
    %v980 = vrot.slane %v756, %v979
    %v981 = vlaneseq
    %v982 = vshrl.u32 %v981, 7
    %v983 = vsub.s32 3, %v982
    %v984 = vrot.slane %v756, %v983
    %v985 = vlaneseq
    %v986 = vshrl.u32 %v985, 7
    %v987 = vsub.s32 4, %v986
    %v988 = vrot.slane %v756, %v987
    %v989 = vlaneseq
    %v990 = vshrl.u32 %v989, 7
    %v991 = vsub.s32 5, %v990
    %v992 = vrot.slane %v756, %v991
    %v993 = vlaneseq
    %v994 = vshrl.u32 %v993, 7
    %v995 = vsub.s32 6, %v994
    %v996 = vrot.slane %v756, %v995
    %v997 = vlaneseq
    %v998 = vshrl.u32 %v997, 7
    %v999 = vsub.s32 7, %v998
    %v1000 = vrot.slane %v756, %v999
    %v1001 = vlaneseq
    %v1002 = vshrl.u32 %v1001, 7
    %v1003 = vsub.s32 0, %v1002
    %v1004 = vrot.slane %v759, %v1003
    %v1005 = vlaneseq
    %v1006 = vshrl.u32 %v1005, 7
    %v1007 = vsub.s32 1, %v1006
    %v1008 = vrot.slane %v759, %v1007
    %v1009 = vlaneseq
    %v1010 = vshrl.u32 %v1009, 7
    %v1011 = vsub.s32 2, %v1010
    %v1012 = vrot.slane %v759, %v1011
    %v1013 = vlaneseq
    %v1014 = vshrl.u32 %v1013, 7
    %v1015 = vsub.s32 3, %v1014
    %v1016 = vrot.slane %v759, %v1015
    %v1017 = vlaneseq
    %v1018 = vshrl.u32 %v1017, 7
    %v1019 = vsub.s32 4, %v1018
    %v1020 = vrot.slane %v759, %v1019
    %v1021 = vlaneseq
    %v1022 = vshrl.u32 %v1021, 7
    %v1023 = vsub.s32 5, %v1022
    %v1024 = vrot.slane %v759, %v1023
    %v1025 = vlaneseq
    %v1026 = vshrl.u32 %v1025, 7
    %v1027 = vsub.s32 6, %v1026
    %v1028 = vrot.slane %v759, %v1027
    %v1029 = vlaneseq
    %v1030 = vshrl.u32 %v1029, 7
    %v1031 = vsub.s32 7, %v1030
    %v1032 = vrot.slane %v759, %v1031
    %v1033 = vlaneseq
    %v1034 = vshrl.u32 %v1033, 7
    %v1035 = vsub.s32 0, %v1034
    %v1036 = vrot.slane %v762, %v1035
    %v1037 = vlaneseq
    %v1038 = vshrl.u32 %v1037, 7
    %v1039 = vsub.s32 1, %v1038
    %v1040 = vrot.slane %v762, %v1039
    %v1041 = vlaneseq
    %v1042 = vshrl.u32 %v1041, 7
    %v1043 = vsub.s32 2, %v1042
    %v1044 = vrot.slane %v762, %v1043
    %v1045 = vlaneseq
    %v1046 = vshrl.u32 %v1045, 7
    %v1047 = vsub.s32 3, %v1046
    %v1048 = vrot.slane %v762, %v1047
    %v1049 = vlaneseq
    %v1050 = vshrl.u32 %v1049, 7
    %v1051 = vsub.s32 4, %v1050
    %v1052 = vrot.slane %v762, %v1051
    %v1053 = vlaneseq
    %v1054 = vshrl.u32 %v1053, 7
    %v1055 = vsub.s32 5, %v1054
    %v1056 = vrot.slane %v762, %v1055
    %v1057 = vlaneseq
    %v1058 = vshrl.u32 %v1057, 7
    %v1059 = vsub.s32 6, %v1058
    %v1060 = vrot.slane %v762, %v1059
    %v1061 = vlaneseq
    %v1062 = vshrl.u32 %v1061, 7
    %v1063 = vsub.s32 7, %v1062
    %v1064 = vrot.slane %v762, %v1063
    %v1065 = vlaneseq
    %v1066 = vshrl.u32 %v1065, 7
    %v1067 = vsub.s32 0, %v1066
    %v1068 = vrot.slane %v765, %v1067
    %v1069 = vlaneseq
    %v1070 = vshrl.u32 %v1069, 7
    %v1071 = vsub.s32 1, %v1070
    %v1072 = vrot.slane %v765, %v1071
    %v1073 = vlaneseq
    %v1074 = vshrl.u32 %v1073, 7
    %v1075 = vsub.s32 2, %v1074
    %v1076 = vrot.slane %v765, %v1075
    %v1077 = vlaneseq
    %v1078 = vshrl.u32 %v1077, 7
    %v1079 = vsub.s32 3, %v1078
    %v1080 = vrot.slane %v765, %v1079
    %v1081 = vlaneseq
    %v1082 = vshrl.u32 %v1081, 7
    %v1083 = vsub.s32 4, %v1082
    %v1084 = vrot.slane %v765, %v1083
    %v1085 = vlaneseq
    %v1086 = vshrl.u32 %v1085, 7
    %v1087 = vsub.s32 5, %v1086
    %v1088 = vrot.slane %v765, %v1087
    %v1089 = vlaneseq
    %v1090 = vshrl.u32 %v1089, 7
    %v1091 = vsub.s32 6, %v1090
    %v1092 = vrot.slane %v765, %v1091
    %v1093 = vlaneseq
    %v1094 = vshrl.u32 %v1093, 7
    %v1095 = vsub.s32 7, %v1094
    %v1096 = vrot.slane %v765, %v1095
    %v1097 = vlaneseq
    %v1098 = vshrl.u32 %v1097, 7
    %v1099 = vsub.s32 0, %v1098
    %v1100 = vrot.slane %v768, %v1099
    %v1101 = vlaneseq
    %v1102 = vshrl.u32 %v1101, 7
    %v1103 = vsub.s32 1, %v1102
    %v1104 = vrot.slane %v768, %v1103
    %v1105 = vlaneseq
    %v1106 = vshrl.u32 %v1105, 7
    %v1107 = vsub.s32 2, %v1106
    %v1108 = vrot.slane %v768, %v1107
    %v1109 = vlaneseq
    %v1110 = vshrl.u32 %v1109, 7
    %v1111 = vsub.s32 3, %v1110
    %v1112 = vrot.slane %v768, %v1111
    %v1113 = vlaneseq
    %v1114 = vshrl.u32 %v1113, 7
    %v1115 = vsub.s32 4, %v1114
    %v1116 = vrot.slane %v768, %v1115
    %v1117 = vlaneseq
    %v1118 = vshrl.u32 %v1117, 7
    %v1119 = vsub.s32 5, %v1118
    %v1120 = vrot.slane %v768, %v1119
    %v1121 = vlaneseq
    %v1122 = vshrl.u32 %v1121, 7
    %v1123 = vsub.s32 6, %v1122
    %v1124 = vrot.slane %v768, %v1123
    %v1125 = vlaneseq
    %v1126 = vshrl.u32 %v1125, 7
    %v1127 = vsub.s32 7, %v1126
    %v1128 = vrot.slane %v768, %v1127
    %v1129 = vlaneseq
    %v1130 = vshrl.u32 %v1129, 7
    %v1131 = vsub.s32 0, %v1130
    %v1132 = vrot.slane %v771, %v1131
    %v1133 = vlaneseq
    %v1134 = vshrl.u32 %v1133, 7
    %v1135 = vsub.s32 1, %v1134
    %v1136 = vrot.slane %v771, %v1135
    %v1137 = vlaneseq
    %v1138 = vshrl.u32 %v1137, 7
    %v1139 = vsub.s32 2, %v1138
    %v1140 = vrot.slane %v771, %v1139
    %v1141 = vlaneseq
    %v1142 = vshrl.u32 %v1141, 7
    %v1143 = vsub.s32 3, %v1142
    %v1144 = vrot.slane %v771, %v1143
    %v1145 = vlaneseq
    %v1146 = vshrl.u32 %v1145, 7
    %v1147 = vsub.s32 4, %v1146
    %v1148 = vrot.slane %v771, %v1147
    %v1149 = vlaneseq
    %v1150 = vshrl.u32 %v1149, 7
    %v1151 = vsub.s32 5, %v1150
    %v1152 = vrot.slane %v771, %v1151
    %v1153 = vlaneseq
    %v1154 = vshrl.u32 %v1153, 7
    %v1155 = vsub.s32 6, %v1154
    %v1156 = vrot.slane %v771, %v1155
    %v1157 = vlaneseq
    %v1158 = vshrl.u32 %v1157, 7
    %v1159 = vsub.s32 7, %v1158
    %v1160 = vrot.slane %v771, %v1159
    %v1161 = vlaneseq
    %v1162 = vshrl.u32 %v1161, 7
    %v1163 = vsub.s32 0, %v1162
    %v1164 = vrot.slane %v774, %v1163
    %v1165 = vlaneseq
    %v1166 = vshrl.u32 %v1165, 7
    %v1167 = vsub.s32 1, %v1166
    %v1168 = vrot.slane %v774, %v1167
    %v1169 = vlaneseq
    %v1170 = vshrl.u32 %v1169, 7
    %v1171 = vsub.s32 2, %v1170
    %v1172 = vrot.slane %v774, %v1171
    %v1173 = vlaneseq
    %v1174 = vshrl.u32 %v1173, 7
    %v1175 = vsub.s32 3, %v1174
    %v1176 = vrot.slane %v774, %v1175
    %v1177 = vlaneseq
    %v1178 = vshrl.u32 %v1177, 7
    %v1179 = vsub.s32 4, %v1178
    %v1180 = vrot.slane %v774, %v1179
    %v1181 = vlaneseq
    %v1182 = vshrl.u32 %v1181, 7
    %v1183 = vsub.s32 5, %v1182
    %v1184 = vrot.slane %v774, %v1183
    %v1185 = vlaneseq
    %v1186 = vshrl.u32 %v1185, 7
    %v1187 = vsub.s32 6, %v1186
    %v1188 = vrot.slane %v774, %v1187
    %v1189 = vlaneseq
    %v1190 = vshrl.u32 %v1189, 7
    %v1191 = vsub.s32 7, %v1190
    %v1192 = vrot.slane %v774, %v1191
    %v1193 = vlaneseq
    %v1194 = vshrl.u32 %v1193, 7
    %v1195 = vsub.s32 0, %v1194
    %v1196 = vrot.slane %v777, %v1195
    %v1197 = vlaneseq
    %v1198 = vshrl.u32 %v1197, 7
    %v1199 = vsub.s32 1, %v1198
    %v1200 = vrot.slane %v777, %v1199
    %v1201 = vlaneseq
    %v1202 = vshrl.u32 %v1201, 7
    %v1203 = vsub.s32 2, %v1202
    %v1204 = vrot.slane %v777, %v1203
    %v1205 = vlaneseq
    %v1206 = vshrl.u32 %v1205, 7
    %v1207 = vsub.s32 3, %v1206
    %v1208 = vrot.slane %v777, %v1207
    %v1209 = vlaneseq
    %v1210 = vshrl.u32 %v1209, 7
    %v1211 = vsub.s32 4, %v1210
    %v1212 = vrot.slane %v777, %v1211
    %v1213 = vlaneseq
    %v1214 = vshrl.u32 %v1213, 7
    %v1215 = vsub.s32 5, %v1214
    %v1216 = vrot.slane %v777, %v1215
    %v1217 = vlaneseq
    %v1218 = vshrl.u32 %v1217, 7
    %v1219 = vsub.s32 6, %v1218
    %v1220 = vrot.slane %v777, %v1219
    %v1221 = vlaneseq
    %v1222 = vshrl.u32 %v1221, 7
    %v1223 = vsub.s32 7, %v1222
    %v1224 = vrot.slane %v777, %v1223
    %v1225 = vlaneseq
    %v1226 = vshrl.u32 %v1225, 7
    %v1227 = vsub.s32 0, %v1226
    %v1228 = vrot.slane %v780, %v1227
    %v1229 = vlaneseq
    %v1230 = vshrl.u32 %v1229, 7
    %v1231 = vsub.s32 1, %v1230
    %v1232 = vrot.slane %v780, %v1231
    %v1233 = vlaneseq
    %v1234 = vshrl.u32 %v1233, 7
    %v1235 = vsub.s32 2, %v1234
    %v1236 = vrot.slane %v780, %v1235
    %v1237 = vlaneseq
    %v1238 = vshrl.u32 %v1237, 7
    %v1239 = vsub.s32 3, %v1238
    %v1240 = vrot.slane %v780, %v1239
    %v1241 = vlaneseq
    %v1242 = vshrl.u32 %v1241, 7
    %v1243 = vsub.s32 4, %v1242
    %v1244 = vrot.slane %v780, %v1243
    %v1245 = vlaneseq
    %v1246 = vshrl.u32 %v1245, 7
    %v1247 = vsub.s32 5, %v1246
    %v1248 = vrot.slane %v780, %v1247
    %v1249 = vlaneseq
    %v1250 = vshrl.u32 %v1249, 7
    %v1251 = vsub.s32 6, %v1250
    %v1252 = vrot.slane %v780, %v1251
    %v1253 = vlaneseq
    %v1254 = vshrl.u32 %v1253, 7
    %v1255 = vsub.s32 7, %v1254
    %v1256 = vrot.slane %v780, %v1255
    %v1257 = vlaneseq
    %v1258 = vshrl.u32 %v1257, 7
    %v1259 = vsub.s32 0, %v1258
    %v1260 = vrot.slane %v783, %v1259
    %v1261 = vlaneseq
    %v1262 = vshrl.u32 %v1261, 7
    %v1263 = vsub.s32 1, %v1262
    %v1264 = vrot.slane %v783, %v1263
    %v1265 = vlaneseq
    %v1266 = vshrl.u32 %v1265, 7
    %v1267 = vsub.s32 2, %v1266
    %v1268 = vrot.slane %v783, %v1267
    %v1269 = vlaneseq
    %v1270 = vshrl.u32 %v1269, 7
    %v1271 = vsub.s32 3, %v1270
    %v1272 = vrot.slane %v783, %v1271
    %v1273 = vlaneseq
    %v1274 = vshrl.u32 %v1273, 7
    %v1275 = vsub.s32 4, %v1274
    %v1276 = vrot.slane %v783, %v1275
    %v1277 = vlaneseq
    %v1278 = vshrl.u32 %v1277, 7
    %v1279 = vsub.s32 5, %v1278
    %v1280 = vrot.slane %v783, %v1279
    %v1281 = vlaneseq
    %v1282 = vshrl.u32 %v1281, 7
    %v1283 = vsub.s32 6, %v1282
    %v1284 = vrot.slane %v783, %v1283
    %v1285 = vlaneseq
    %v1286 = vshrl.u32 %v1285, 7
    %v1287 = vsub.s32 7, %v1286
    %v1288 = vrot.slane %v783, %v1287
    %v1289 = vlaneseq
    %v1290 = vshrl.u32 %v1289, 7
    %v1291 = vsub.s32 0, %v1290
    %v1292 = vrot.slane %v786, %v1291
    %v1293 = vlaneseq
    %v1294 = vshrl.u32 %v1293, 7
    %v1295 = vsub.s32 1, %v1294
    %v1296 = vrot.slane %v786, %v1295
    %v1297 = vlaneseq
    %v1298 = vshrl.u32 %v1297, 7
    %v1299 = vsub.s32 2, %v1298
    %v1300 = vrot.slane %v786, %v1299
    %v1301 = vlaneseq
    %v1302 = vshrl.u32 %v1301, 7
    %v1303 = vsub.s32 3, %v1302
    %v1304 = vrot.slane %v786, %v1303
    %v1305 = vlaneseq
    %v1306 = vshrl.u32 %v1305, 7
    %v1307 = vsub.s32 4, %v1306
    %v1308 = vrot.slane %v786, %v1307
    %v1309 = vlaneseq
    %v1310 = vshrl.u32 %v1309, 7
    %v1311 = vsub.s32 5, %v1310
    %v1312 = vrot.slane %v786, %v1311
    %v1313 = vlaneseq
    %v1314 = vshrl.u32 %v1313, 7
    %v1315 = vsub.s32 6, %v1314
    %v1316 = vrot.slane %v786, %v1315
    %v1317 = vlaneseq
    %v1318 = vshrl.u32 %v1317, 7
    %v1319 = vsub.s32 7, %v1318
    %v1320 = vrot.slane %v786, %v1319
    %v1321 = vlaneseq
    %v1322 = vshrl.u32 %v1321, 7
    %v1323 = vsub.s32 0, %v1322
    %v1324 = vrot.slane %v789, %v1323
    %v1325 = vlaneseq
    %v1326 = vshrl.u32 %v1325, 7
    %v1327 = vsub.s32 1, %v1326
    %v1328 = vrot.slane %v789, %v1327
    %v1329 = vlaneseq
    %v1330 = vshrl.u32 %v1329, 7
    %v1331 = vsub.s32 2, %v1330
    %v1332 = vrot.slane %v789, %v1331
    %v1333 = vlaneseq
    %v1334 = vshrl.u32 %v1333, 7
    %v1335 = vsub.s32 3, %v1334
    %v1336 = vrot.slane %v789, %v1335
    %v1337 = vlaneseq
    %v1338 = vshrl.u32 %v1337, 7
    %v1339 = vsub.s32 4, %v1338
    %v1340 = vrot.slane %v789, %v1339
    %v1341 = vlaneseq
    %v1342 = vshrl.u32 %v1341, 7
    %v1343 = vsub.s32 5, %v1342
    %v1344 = vrot.slane %v789, %v1343
    %v1345 = vlaneseq
    %v1346 = vshrl.u32 %v1345, 7
    %v1347 = vsub.s32 6, %v1346
    %v1348 = vrot.slane %v789, %v1347
    %v1349 = vlaneseq
    %v1350 = vshrl.u32 %v1349, 7
    %v1351 = vsub.s32 7, %v1350
    %v1352 = vrot.slane %v789, %v1351
    %v1353 = vlaneseq
    %v1354 = vshrl.u32 %v1353, 7
    %v1355 = vsub.s32 0, %v1354
    %v1356 = vrot.slane %v792, %v1355
    %v1357 = vlaneseq
    %v1358 = vshrl.u32 %v1357, 7
    %v1359 = vsub.s32 1, %v1358
    %v1360 = vrot.slane %v792, %v1359
    %v1361 = vlaneseq
    %v1362 = vshrl.u32 %v1361, 7
    %v1363 = vsub.s32 2, %v1362
    %v1364 = vrot.slane %v792, %v1363
    %v1365 = vlaneseq
    %v1366 = vshrl.u32 %v1365, 7
    %v1367 = vsub.s32 3, %v1366
    %v1368 = vrot.slane %v792, %v1367
    %v1369 = vlaneseq
    %v1370 = vshrl.u32 %v1369, 7
    %v1371 = vsub.s32 4, %v1370
    %v1372 = vrot.slane %v792, %v1371
    %v1373 = vlaneseq
    %v1374 = vshrl.u32 %v1373, 7
    %v1375 = vsub.s32 5, %v1374
    %v1376 = vrot.slane %v792, %v1375
    %v1377 = vlaneseq
    %v1378 = vshrl.u32 %v1377, 7
    %v1379 = vsub.s32 6, %v1378
    %v1380 = vrot.slane %v792, %v1379
    %v1381 = vlaneseq
    %v1382 = vshrl.u32 %v1381, 7
    %v1383 = vsub.s32 7, %v1382
    %v1384 = vrot.slane %v792, %v1383
    %v1385 = vlaneseq
    %v1386 = vshrl.u32 %v1385, 7
    %v1387 = vsub.s32 0, %v1386
    %v1388 = vrot.slane %v795, %v1387
    %v1389 = vlaneseq
    %v1390 = vshrl.u32 %v1389, 7
    %v1391 = vsub.s32 1, %v1390
    %v1392 = vrot.slane %v795, %v1391
    %v1393 = vlaneseq
    %v1394 = vshrl.u32 %v1393, 7
    %v1395 = vsub.s32 2, %v1394
    %v1396 = vrot.slane %v795, %v1395
    %v1397 = vlaneseq
    %v1398 = vshrl.u32 %v1397, 7
    %v1399 = vsub.s32 3, %v1398
    %v1400 = vrot.slane %v795, %v1399
    %v1401 = vlaneseq
    %v1402 = vshrl.u32 %v1401, 7
    %v1403 = vsub.s32 4, %v1402
    %v1404 = vrot.slane %v795, %v1403
    %v1405 = vlaneseq
    %v1406 = vshrl.u32 %v1405, 7
    %v1407 = vsub.s32 5, %v1406
    %v1408 = vrot.slane %v795, %v1407
    %v1409 = vlaneseq
    %v1410 = vshrl.u32 %v1409, 7
    %v1411 = vsub.s32 6, %v1410
    %v1412 = vrot.slane %v795, %v1411
    %v1413 = vlaneseq
    %v1414 = vshrl.u32 %v1413, 7
    %v1415 = vsub.s32 7, %v1414
    %v1416 = vrot.slane %v795, %v1415
    %v1417 = vlaneseq
    %v1418 = vshrl.u32 %v1417, 7
    %v1419 = vsub.s32 0, %v1418
    %v1420 = vrot.slane %v798, %v1419
    %v1421 = vlaneseq
    %v1422 = vshrl.u32 %v1421, 7
    %v1423 = vsub.s32 1, %v1422
    %v1424 = vrot.slane %v798, %v1423
    %v1425 = vlaneseq
    %v1426 = vshrl.u32 %v1425, 7
    %v1427 = vsub.s32 2, %v1426
    %v1428 = vrot.slane %v798, %v1427
    %v1429 = vlaneseq
    %v1430 = vshrl.u32 %v1429, 7
    %v1431 = vsub.s32 3, %v1430
    %v1432 = vrot.slane %v798, %v1431
    %v1433 = vlaneseq
    %v1434 = vshrl.u32 %v1433, 7
    %v1435 = vsub.s32 4, %v1434
    %v1436 = vrot.slane %v798, %v1435
    %v1437 = vlaneseq
    %v1438 = vshrl.u32 %v1437, 7
    %v1439 = vsub.s32 5, %v1438
    %v1440 = vrot.slane %v798, %v1439
    %v1441 = vlaneseq
    %v1442 = vshrl.u32 %v1441, 7
    %v1443 = vsub.s32 6, %v1442
    %v1444 = vrot.slane %v798, %v1443
    %v1445 = vlaneseq
    %v1446 = vshrl.u32 %v1445, 7
    %v1447 = vsub.s32 7, %v1446
    %v1448 = vrot.slane %v798, %v1447
    %v1449 = vlaneseq
    %v1450 = vshrl.u32 %v1449, 7
    %v1451 = vsub.s32 0, %v1450
    %v1452 = vrot.slane %v801, %v1451
    %v1453 = vlaneseq
    %v1454 = vshrl.u32 %v1453, 7
    %v1455 = vsub.s32 1, %v1454
    %v1456 = vrot.slane %v801, %v1455
    %v1457 = vlaneseq
    %v1458 = vshrl.u32 %v1457, 7
    %v1459 = vsub.s32 2, %v1458
    %v1460 = vrot.slane %v801, %v1459
    %v1461 = vlaneseq
    %v1462 = vshrl.u32 %v1461, 7
    %v1463 = vsub.s32 3, %v1462
    %v1464 = vrot.slane %v801, %v1463
    %v1465 = vlaneseq
    %v1466 = vshrl.u32 %v1465, 7
    %v1467 = vsub.s32 4, %v1466
    %v1468 = vrot.slane %v801, %v1467
    %v1469 = vlaneseq
    %v1470 = vshrl.u32 %v1469, 7
    %v1471 = vsub.s32 5, %v1470
    %v1472 = vrot.slane %v801, %v1471
    %v1473 = vlaneseq
    %v1474 = vshrl.u32 %v1473, 7
    %v1475 = vsub.s32 6, %v1474
    %v1476 = vrot.slane %v801, %v1475
    %v1477 = vlaneseq
    %v1478 = vshrl.u32 %v1477, 7
    %v1479 = vsub.s32 7, %v1478
    %v1480 = vrot.slane %v801, %v1479
    %v1481 = vlaneseq
    %v1482 = vshrl.u32 %v1481, 7
    %v1483 = vsub.s32 0, %v1482
    %v1484 = vrot.slane %v804, %v1483
    %v1485 = vlaneseq
    %v1486 = vshrl.u32 %v1485, 7
    %v1487 = vsub.s32 1, %v1486
    %v1488 = vrot.slane %v804, %v1487
    %v1489 = vlaneseq
    %v1490 = vshrl.u32 %v1489, 7
    %v1491 = vsub.s32 2, %v1490
    %v1492 = vrot.slane %v804, %v1491
    %v1493 = vlaneseq
    %v1494 = vshrl.u32 %v1493, 7
    %v1495 = vsub.s32 3, %v1494
    %v1496 = vrot.slane %v804, %v1495
    %v1497 = vlaneseq
    %v1498 = vshrl.u32 %v1497, 7
    %v1499 = vsub.s32 4, %v1498
    %v1500 = vrot.slane %v804, %v1499
    %v1501 = vlaneseq
    %v1502 = vshrl.u32 %v1501, 7
    %v1503 = vsub.s32 5, %v1502
    %v1504 = vrot.slane %v804, %v1503
    %v1505 = vlaneseq
    %v1506 = vshrl.u32 %v1505, 7
    %v1507 = vsub.s32 6, %v1506
    %v1508 = vrot.slane %v804, %v1507
    %v1509 = vlaneseq
    %v1510 = vshrl.u32 %v1509, 7
    %v1511 = vsub.s32 7, %v1510
    %v1512 = vrot.slane %v804, %v1511
    %v1513 = vlaneseq
    %v1514 = vshrl.u32 %v1513, 7
    %v1515 = vsub.s32 0, %v1514
    %v1516 = vrot.slane %v807, %v1515
    %v1517 = vlaneseq
    %v1518 = vshrl.u32 %v1517, 7
    %v1519 = vsub.s32 1, %v1518
    %v1520 = vrot.slane %v807, %v1519
    %v1521 = vlaneseq
    %v1522 = vshrl.u32 %v1521, 7
    %v1523 = vsub.s32 2, %v1522
    %v1524 = vrot.slane %v807, %v1523
    %v1525 = vlaneseq
    %v1526 = vshrl.u32 %v1525, 7
    %v1527 = vsub.s32 3, %v1526
    %v1528 = vrot.slane %v807, %v1527
    %v1529 = vlaneseq
    %v1530 = vshrl.u32 %v1529, 7
    %v1531 = vsub.s32 4, %v1530
    %v1532 = vrot.slane %v807, %v1531
    %v1533 = vlaneseq
    %v1534 = vshrl.u32 %v1533, 7
    %v1535 = vsub.s32 5, %v1534
    %v1536 = vrot.slane %v807, %v1535
    %v1537 = vlaneseq
    %v1538 = vshrl.u32 %v1537, 7
    %v1539 = vsub.s32 6, %v1538
    %v1540 = vrot.slane %v807, %v1539
    %v1541 = vlaneseq
    %v1542 = vshrl.u32 %v1541, 7
    %v1543 = vsub.s32 7, %v1542
    %v1544 = vrot.slane %v807, %v1543
    %v1545 = vlaneseq
    %v1546 = vshrl.u32 %v1545, 7
    %v1547 = vsub.s32 0, %v1546
    %v1548 = vrot.slane %v810, %v1547
    %v1549 = vlaneseq
    %v1550 = vshrl.u32 %v1549, 7
    %v1551 = vsub.s32 1, %v1550
    %v1552 = vrot.slane %v810, %v1551
    %v1553 = vlaneseq
    %v1554 = vshrl.u32 %v1553, 7
    %v1555 = vsub.s32 2, %v1554
    %v1556 = vrot.slane %v810, %v1555
    %v1557 = vlaneseq
    %v1558 = vshrl.u32 %v1557, 7
    %v1559 = vsub.s32 3, %v1558
    %v1560 = vrot.slane %v810, %v1559
    %v1561 = vlaneseq
    %v1562 = vshrl.u32 %v1561, 7
    %v1563 = vsub.s32 4, %v1562
    %v1564 = vrot.slane %v810, %v1563
    %v1565 = vlaneseq
    %v1566 = vshrl.u32 %v1565, 7
    %v1567 = vsub.s32 5, %v1566
    %v1568 = vrot.slane %v810, %v1567
    %v1569 = vlaneseq
    %v1570 = vshrl.u32 %v1569, 7
    %v1571 = vsub.s32 6, %v1570
    %v1572 = vrot.slane %v810, %v1571
    %v1573 = vlaneseq
    %v1574 = vshrl.u32 %v1573, 7
    %v1575 = vsub.s32 7, %v1574
    %v1576 = vrot.slane %v810, %v1575
    %v1577 = vlaneseq
    %v1578 = vshrl.u32 %v1577, 7
    %v1579 = vsub.s32 0, %v1578
    %v1580 = vrot.slane %v813, %v1579
    %v1581 = vlaneseq
    %v1582 = vshrl.u32 %v1581, 7
    %v1583 = vsub.s32 1, %v1582
    %v1584 = vrot.slane %v813, %v1583
    %v1585 = vlaneseq
    %v1586 = vshrl.u32 %v1585, 7
    %v1587 = vsub.s32 2, %v1586
    %v1588 = vrot.slane %v813, %v1587
    %v1589 = vlaneseq
    %v1590 = vshrl.u32 %v1589, 7
    %v1591 = vsub.s32 3, %v1590
    %v1592 = vrot.slane %v813, %v1591
    %v1593 = vlaneseq
    %v1594 = vshrl.u32 %v1593, 7
    %v1595 = vsub.s32 4, %v1594
    %v1596 = vrot.slane %v813, %v1595
    %v1597 = vlaneseq
    %v1598 = vshrl.u32 %v1597, 7
    %v1599 = vsub.s32 5, %v1598
    %v1600 = vrot.slane %v813, %v1599
    %v1601 = vlaneseq
    %v1602 = vshrl.u32 %v1601, 7
    %v1603 = vsub.s32 6, %v1602
    %v1604 = vrot.slane %v813, %v1603
    %v1605 = vlaneseq
    %v1606 = vshrl.u32 %v1605, 7
    %v1607 = vsub.s32 7, %v1606
    %v1608 = vrot.slane %v813, %v1607
    %v1609 = vlaneseq
    %v1610 = vshrl.u32 %v1609, 7
    %v1611 = vsub.s32 0, %v1610
    %v1612 = vrot.slane %v816, %v1611
    %v1613 = vlaneseq
    %v1614 = vshrl.u32 %v1613, 7
    %v1615 = vsub.s32 1, %v1614
    %v1616 = vrot.slane %v816, %v1615
    %v1617 = vlaneseq
    %v1618 = vshrl.u32 %v1617, 7
    %v1619 = vsub.s32 2, %v1618
    %v1620 = vrot.slane %v816, %v1619
    %v1621 = vlaneseq
    %v1622 = vshrl.u32 %v1621, 7
    %v1623 = vsub.s32 3, %v1622
    %v1624 = vrot.slane %v816, %v1623
    %v1625 = vlaneseq
    %v1626 = vshrl.u32 %v1625, 7
    %v1627 = vsub.s32 4, %v1626
    %v1628 = vrot.slane %v816, %v1627
    %v1629 = vlaneseq
    %v1630 = vshrl.u32 %v1629, 7
    %v1631 = vsub.s32 5, %v1630
    %v1632 = vrot.slane %v816, %v1631
    %v1633 = vlaneseq
    %v1634 = vshrl.u32 %v1633, 7
    %v1635 = vsub.s32 6, %v1634
    %v1636 = vrot.slane %v816, %v1635
    %v1637 = vlaneseq
    %v1638 = vshrl.u32 %v1637, 7
    %v1639 = vsub.s32 7, %v1638
    %v1640 = vrot.slane %v816, %v1639
    %v1641 = vlaneseq
    %v1642 = vshrl.u32 %v1641, 7
    %v1643 = vsub.s32 0, %v1642
    %v1644 = vrot.slane %v819, %v1643
    %v1645 = vlaneseq
    %v1646 = vshrl.u32 %v1645, 7
    %v1647 = vsub.s32 1, %v1646
    %v1648 = vrot.slane %v819, %v1647
    %v1649 = vlaneseq
    %v1650 = vshrl.u32 %v1649, 7
    %v1651 = vsub.s32 2, %v1650
    %v1652 = vrot.slane %v819, %v1651
    %v1653 = vlaneseq
    %v1654 = vshrl.u32 %v1653, 7
    %v1655 = vsub.s32 3, %v1654
    %v1656 = vrot.slane %v819, %v1655
    %v1657 = vlaneseq
    %v1658 = vshrl.u32 %v1657, 7
    %v1659 = vsub.s32 4, %v1658
    %v1660 = vrot.slane %v819, %v1659
    %v1661 = vlaneseq
    %v1662 = vshrl.u32 %v1661, 7
    %v1663 = vsub.s32 5, %v1662
    %v1664 = vrot.slane %v819, %v1663
    %v1665 = vlaneseq
    %v1666 = vshrl.u32 %v1665, 7
    %v1667 = vsub.s32 6, %v1666
    %v1668 = vrot.slane %v819, %v1667
    %v1669 = vlaneseq
    %v1670 = vshrl.u32 %v1669, 7
    %v1671 = vsub.s32 7, %v1670
    %v1672 = vrot.slane %v819, %v1671
    %v1673 = vlaneseq
    %v1674 = vshrl.u32 %v1673, 7
    %v1675 = vsub.s32 0, %v1674
    %v1676 = vrot.slane %v822, %v1675
    %v1677 = vlaneseq
    %v1678 = vshrl.u32 %v1677, 7
    %v1679 = vsub.s32 1, %v1678
    %v1680 = vrot.slane %v822, %v1679
    %v1681 = vlaneseq
    %v1682 = vshrl.u32 %v1681, 7
    %v1683 = vsub.s32 2, %v1682
    %v1684 = vrot.slane %v822, %v1683
    %v1685 = vlaneseq
    %v1686 = vshrl.u32 %v1685, 7
    %v1687 = vsub.s32 3, %v1686
    %v1688 = vrot.slane %v822, %v1687
    %v1689 = vlaneseq
    %v1690 = vshrl.u32 %v1689, 7
    %v1691 = vsub.s32 4, %v1690
    %v1692 = vrot.slane %v822, %v1691
    %v1693 = vlaneseq
    %v1694 = vshrl.u32 %v1693, 7
    %v1695 = vsub.s32 5, %v1694
    %v1696 = vrot.slane %v822, %v1695
    %v1697 = vlaneseq
    %v1698 = vshrl.u32 %v1697, 7
    %v1699 = vsub.s32 6, %v1698
    %v1700 = vrot.slane %v822, %v1699
    %v1701 = vlaneseq
    %v1702 = vshrl.u32 %v1701, 7
    %v1703 = vsub.s32 7, %v1702
    %v1704 = vrot.slane %v822, %v1703
    %v1705 = vlaneseq
    %v1706 = vshrl.u32 %v1705, 7
    %v1707 = vsub.s32 0, %v1706
    %v1708 = vrot.slane %v825, %v1707
    %v1709 = vlaneseq
    %v1710 = vshrl.u32 %v1709, 7
    %v1711 = vsub.s32 1, %v1710
    %v1712 = vrot.slane %v825, %v1711
    %v1713 = vlaneseq
    %v1714 = vshrl.u32 %v1713, 7
    %v1715 = vsub.s32 2, %v1714
    %v1716 = vrot.slane %v825, %v1715
    %v1717 = vlaneseq
    %v1718 = vshrl.u32 %v1717, 7
    %v1719 = vsub.s32 3, %v1718
    %v1720 = vrot.slane %v825, %v1719
    %v1721 = vlaneseq
    %v1722 = vshrl.u32 %v1721, 7
    %v1723 = vsub.s32 4, %v1722
    %v1724 = vrot.slane %v825, %v1723
    %v1725 = vlaneseq
    %v1726 = vshrl.u32 %v1725, 7
    %v1727 = vsub.s32 5, %v1726
    %v1728 = vrot.slane %v825, %v1727
    %v1729 = vlaneseq
    %v1730 = vshrl.u32 %v1729, 7
    %v1731 = vsub.s32 6, %v1730
    %v1732 = vrot.slane %v825, %v1731
    %v1733 = vlaneseq
    %v1734 = vshrl.u32 %v1733, 7
    %v1735 = vsub.s32 7, %v1734
    %v1736 = vrot.slane %v825, %v1735
    %v1737 = vlaneseq
    %v1738 = vshrl.u32 %v1737, 7
    %v1739 = vsub.s32 0, %v1738
    %v1740 = vrot.slane %v828, %v1739
    %v1741 = vlaneseq
    %v1742 = vshrl.u32 %v1741, 7
    %v1743 = vsub.s32 1, %v1742
    %v1744 = vrot.slane %v828, %v1743
    %v1745 = vlaneseq
    %v1746 = vshrl.u32 %v1745, 7
    %v1747 = vsub.s32 2, %v1746
    %v1748 = vrot.slane %v828, %v1747
    %v1749 = vlaneseq
    %v1750 = vshrl.u32 %v1749, 7
    %v1751 = vsub.s32 3, %v1750
    %v1752 = vrot.slane %v828, %v1751
    %v1753 = vlaneseq
    %v1754 = vshrl.u32 %v1753, 7
    %v1755 = vsub.s32 4, %v1754
    %v1756 = vrot.slane %v828, %v1755
    %v1757 = vlaneseq
    %v1758 = vshrl.u32 %v1757, 7
    %v1759 = vsub.s32 5, %v1758
    %v1760 = vrot.slane %v828, %v1759
    %v1761 = vlaneseq
    %v1762 = vshrl.u32 %v1761, 7
    %v1763 = vsub.s32 6, %v1762
    %v1764 = vrot.slane %v828, %v1763
    %v1765 = vlaneseq
    %v1766 = vshrl.u32 %v1765, 7
    %v1767 = vsub.s32 7, %v1766
    %v1768 = vrot.slane %v828, %v1767
    %v1769 = vlaneseq
    %v1770 = vshrl.u32 %v1769, 7
    %v1771 = vsub.s32 0, %v1770
    %v1772 = vrot.slane %v831, %v1771
    %v1773 = vlaneseq
    %v1774 = vshrl.u32 %v1773, 7
    %v1775 = vsub.s32 1, %v1774
    %v1776 = vrot.slane %v831, %v1775
    %v1777 = vlaneseq
    %v1778 = vshrl.u32 %v1777, 7
    %v1779 = vsub.s32 2, %v1778
    %v1780 = vrot.slane %v831, %v1779
    %v1781 = vlaneseq
    %v1782 = vshrl.u32 %v1781, 7
    %v1783 = vsub.s32 3, %v1782
    %v1784 = vrot.slane %v831, %v1783
    %v1785 = vlaneseq
    %v1786 = vshrl.u32 %v1785, 7
    %v1787 = vsub.s32 4, %v1786
    %v1788 = vrot.slane %v831, %v1787
    %v1789 = vlaneseq
    %v1790 = vshrl.u32 %v1789, 7
    %v1791 = vsub.s32 5, %v1790
    %v1792 = vrot.slane %v831, %v1791
    %v1793 = vlaneseq
    %v1794 = vshrl.u32 %v1793, 7
    %v1795 = vsub.s32 6, %v1794
    %v1796 = vrot.slane %v831, %v1795
    %v1797 = vlaneseq
    %v1798 = vshrl.u32 %v1797, 7
    %v1799 = vsub.s32 7, %v1798
    %v1800 = vrot.slane %v831, %v1799
    %v1801 = vlaneseq
    %v1802 = vshrl.u32 %v1801, 7
    %v1803 = vsub.s32 0, %v1802
    %v1804 = vrot.slane %v834, %v1803
    %v1805 = vlaneseq
    %v1806 = vshrl.u32 %v1805, 7
    %v1807 = vsub.s32 1, %v1806
    %v1808 = vrot.slane %v834, %v1807
    %v1809 = vlaneseq
    %v1810 = vshrl.u32 %v1809, 7
    %v1811 = vsub.s32 2, %v1810
    %v1812 = vrot.slane %v834, %v1811
    %v1813 = vlaneseq
    %v1814 = vshrl.u32 %v1813, 7
    %v1815 = vsub.s32 3, %v1814
    %v1816 = vrot.slane %v834, %v1815
    %v1817 = vlaneseq
    %v1818 = vshrl.u32 %v1817, 7
    %v1819 = vsub.s32 4, %v1818
    %v1820 = vrot.slane %v834, %v1819
    %v1821 = vlaneseq
    %v1822 = vshrl.u32 %v1821, 7
    %v1823 = vsub.s32 5, %v1822
    %v1824 = vrot.slane %v834, %v1823
    %v1825 = vlaneseq
    %v1826 = vshrl.u32 %v1825, 7
    %v1827 = vsub.s32 6, %v1826
    %v1828 = vrot.slane %v834, %v1827
    %v1829 = vlaneseq
    %v1830 = vshrl.u32 %v1829, 7
    %v1831 = vsub.s32 7, %v1830
    %v1832 = vrot.slane %v834, %v1831
    %v1833 = vlaneseq
    %v1834 = vshrl.u32 %v1833, 7
    %v1835 = vsub.s32 0, %v1834
    %v1836 = vrot.slane %v837, %v1835
    %v1837 = vlaneseq
    %v1838 = vshrl.u32 %v1837, 7
    %v1839 = vsub.s32 1, %v1838
    %v1840 = vrot.slane %v837, %v1839
    %v1841 = vlaneseq
    %v1842 = vshrl.u32 %v1841, 7
    %v1843 = vsub.s32 2, %v1842
    %v1844 = vrot.slane %v837, %v1843
    %v1845 = vlaneseq
    %v1846 = vshrl.u32 %v1845, 7
    %v1847 = vsub.s32 3, %v1846
    %v1848 = vrot.slane %v837, %v1847
    %v1849 = vlaneseq
    %v1850 = vshrl.u32 %v1849, 7
    %v1851 = vsub.s32 4, %v1850
    %v1852 = vrot.slane %v837, %v1851
    %v1853 = vlaneseq
    %v1854 = vshrl.u32 %v1853, 7
    %v1855 = vsub.s32 5, %v1854
    %v1856 = vrot.slane %v837, %v1855
    %v1857 = vlaneseq
    %v1858 = vshrl.u32 %v1857, 7
    %v1859 = vsub.s32 6, %v1858
    %v1860 = vrot.slane %v837, %v1859
    %v1861 = vlaneseq
    %v1862 = vshrl.u32 %v1861, 7
    %v1863 = vsub.s32 7, %v1862
    %v1864 = vrot.slane %v837, %v1863
    %v1865 = vlaneseq
    %v1866 = vshrl.u32 %v1865, 7
    %v1867 = vsub.s32 0, %v1866
    %v1868 = vrot.slane %v840, %v1867
    %v1869 = vlaneseq
    %v1870 = vshrl.u32 %v1869, 7
    %v1871 = vsub.s32 1, %v1870
    %v1872 = vrot.slane %v840, %v1871
    %v1873 = vlaneseq
    %v1874 = vshrl.u32 %v1873, 7
    %v1875 = vsub.s32 2, %v1874
    %v1876 = vrot.slane %v840, %v1875
    %v1877 = vlaneseq
    %v1878 = vshrl.u32 %v1877, 7
    %v1879 = vsub.s32 3, %v1878
    %v1880 = vrot.slane %v840, %v1879
    %v1881 = vlaneseq
    %v1882 = vshrl.u32 %v1881, 7
    %v1883 = vsub.s32 4, %v1882
    %v1884 = vrot.slane %v840, %v1883
    %v1885 = vlaneseq
    %v1886 = vshrl.u32 %v1885, 7
    %v1887 = vsub.s32 5, %v1886
    %v1888 = vrot.slane %v840, %v1887
    %v1889 = vlaneseq
    %v1890 = vshrl.u32 %v1889, 7
    %v1891 = vsub.s32 6, %v1890
    %v1892 = vrot.slane %v840, %v1891
    %v1893 = vlaneseq
    %v1894 = vshrl.u32 %v1893, 7
    %v1895 = vsub.s32 7, %v1894
    %v1896 = vrot.slane %v840, %v1895
    %v1897 = vcombine.low %v876, %v880
    %v1898 = vcombine.low %v884, %v888
    %v1899 = vcombine.low %v892, %v896
    %v1900 = vcombine.low %v900, %v904
    %v1902 = vunpack.c.l.s4 1966171168
    %v1903 = vunpack.c.0.s8 %v1902
    %v1904 = vlaneseq
    %v1905 = vshrl.u32 %v1904, 7
    %v1906 = vsub.s32 %v1903, %v1905
    %v1907 = vrot.slane %v1897, %v1906
    %v1909 = vunpack.c.l.s4 1966171168
    %v1910 = vunpack.c.0.s8 %v1909
    %v1911 = vlaneseq
    %v1912 = vshrl.u32 %v1911, 7
    %v1913 = vsub.s32 %v1910, %v1912
    %v1914 = vrot.slane %v1898, %v1913
    %v1916 = vunpack.c.l.s4 1966171168
    %v1917 = vunpack.c.0.s8 %v1916
    %v1918 = vlaneseq
    %v1919 = vshrl.u32 %v1918, 7
    %v1920 = vsub.s32 %v1917, %v1919
    %v1921 = vrot.slane %v1899, %v1920
    %v1923 = vunpack.c.l.s4 1966171168
    %v1924 = vunpack.c.0.s8 %v1923
    %v1925 = vlaneseq
    %v1926 = vshrl.u32 %v1925, 7
    %v1927 = vsub.s32 %v1924, %v1926
    %v1928 = vrot.slane %v1900, %v1927
    %v1929 = vcombine.low %v1907, %v1914
    %v1930 = vcombine.low %v1921, %v1928
    %v1932 = vunpack.c.l.s4 1966171168
    %v1933 = vunpack.c.0.s8 %v1932
    %v1934 = vlaneseq
    %v1935 = vshrl.u32 %v1934, 7
    %v1936 = vsub.s32 %v1933, %v1935
    %v1937 = vrot.slane %v1929, %v1936
    %v1939 = vunpack.c.l.s4 1966171168
    %v1940 = vunpack.c.0.s8 %v1939
    %v1941 = vlaneseq
    %v1942 = vshrl.u32 %v1941, 7
    %v1943 = vsub.s32 %v1940, %v1942
    %v1944 = vrot.slane %v1930, %v1943
    %v1945 = vcombine.low %v1937, %v1944
    %v1946 = vcombine.low %v908, %v912
    %v1947 = vcombine.low %v916, %v920
    %v1948 = vcombine.low %v924, %v928
    %v1949 = vcombine.low %v932, %v936
    %v1951 = vunpack.c.l.s4 1966171168
    %v1952 = vunpack.c.0.s8 %v1951
    %v1953 = vlaneseq
    %v1954 = vshrl.u32 %v1953, 7
    %v1955 = vsub.s32 %v1952, %v1954
    %v1956 = vrot.slane %v1946, %v1955
    %v1958 = vunpack.c.l.s4 1966171168
    %v1959 = vunpack.c.0.s8 %v1958
    %v1960 = vlaneseq
    %v1961 = vshrl.u32 %v1960, 7
    %v1962 = vsub.s32 %v1959, %v1961
    %v1963 = vrot.slane %v1947, %v1962
    %v1965 = vunpack.c.l.s4 1966171168
    %v1966 = vunpack.c.0.s8 %v1965
    %v1967 = vlaneseq
    %v1968 = vshrl.u32 %v1967, 7
    %v1969 = vsub.s32 %v1966, %v1968
    %v1970 = vrot.slane %v1948, %v1969
    %v1972 = vunpack.c.l.s4 1966171168
    %v1973 = vunpack.c.0.s8 %v1972
    %v1974 = vlaneseq
    %v1975 = vshrl.u32 %v1974, 7
    %v1976 = vsub.s32 %v1973, %v1975
    %v1977 = vrot.slane %v1949, %v1976
    %v1978 = vcombine.low %v1956, %v1963
    %v1979 = vcombine.low %v1970, %v1977
    %v1981 = vunpack.c.l.s4 1966171168
    %v1982 = vunpack.c.0.s8 %v1981
    %v1983 = vlaneseq
    %v1984 = vshrl.u32 %v1983, 7
    %v1985 = vsub.s32 %v1982, %v1984
    %v1986 = vrot.slane %v1978, %v1985
    %v1988 = vunpack.c.l.s4 1966171168
    %v1989 = vunpack.c.0.s8 %v1988
    %v1990 = vlaneseq
    %v1991 = vshrl.u32 %v1990, 7
    %v1992 = vsub.s32 %v1989, %v1991
    %v1993 = vrot.slane %v1979, %v1992
    %v1994 = vcombine.low %v1986, %v1993
    %v1995 = vcombine.low %v940, %v944
    %v1996 = vcombine.low %v948, %v952
    %v1997 = vcombine.low %v956, %v960
    %v1998 = vcombine.low %v964, %v968
    %v2000 = vunpack.c.l.s4 1966171168
    %v2001 = vunpack.c.0.s8 %v2000
    %v2002 = vlaneseq
    %v2003 = vshrl.u32 %v2002, 7
    %v2004 = vsub.s32 %v2001, %v2003
    %v2005 = vrot.slane %v1995, %v2004
    %v2007 = vunpack.c.l.s4 1966171168
    %v2008 = vunpack.c.0.s8 %v2007
    %v2009 = vlaneseq
    %v2010 = vshrl.u32 %v2009, 7
    %v2011 = vsub.s32 %v2008, %v2010
    %v2012 = vrot.slane %v1996, %v2011
    %v2014 = vunpack.c.l.s4 1966171168
    %v2015 = vunpack.c.0.s8 %v2014
    %v2016 = vlaneseq
    %v2017 = vshrl.u32 %v2016, 7
    %v2018 = vsub.s32 %v2015, %v2017
    %v2019 = vrot.slane %v1997, %v2018
    %v2021 = vunpack.c.l.s4 1966171168
    %v2022 = vunpack.c.0.s8 %v2021
    %v2023 = vlaneseq
    %v2024 = vshrl.u32 %v2023, 7
    %v2025 = vsub.s32 %v2022, %v2024
    %v2026 = vrot.slane %v1998, %v2025
    %v2027 = vcombine.low %v2005, %v2012
    %v2028 = vcombine.low %v2019, %v2026
    %v2030 = vunpack.c.l.s4 1966171168
    %v2031 = vunpack.c.0.s8 %v2030
    %v2032 = vlaneseq
    %v2033 = vshrl.u32 %v2032, 7
    %v2034 = vsub.s32 %v2031, %v2033
    %v2035 = vrot.slane %v2027, %v2034
    %v2037 = vunpack.c.l.s4 1966171168
    %v2038 = vunpack.c.0.s8 %v2037
    %v2039 = vlaneseq
    %v2040 = vshrl.u32 %v2039, 7
    %v2041 = vsub.s32 %v2038, %v2040
    %v2042 = vrot.slane %v2028, %v2041
    %v2043 = vcombine.low %v2035, %v2042
    %v2044 = vcombine.low %v972, %v976
    %v2045 = vcombine.low %v980, %v984
    %v2046 = vcombine.low %v988, %v992
    %v2047 = vcombine.low %v996, %v1000
    %v2049 = vunpack.c.l.s4 1966171168
    %v2050 = vunpack.c.0.s8 %v2049
    %v2051 = vlaneseq
    %v2052 = vshrl.u32 %v2051, 7
    %v2053 = vsub.s32 %v2050, %v2052
    %v2054 = vrot.slane %v2044, %v2053
    %v2056 = vunpack.c.l.s4 1966171168
    %v2057 = vunpack.c.0.s8 %v2056
    %v2058 = vlaneseq
    %v2059 = vshrl.u32 %v2058, 7
    %v2060 = vsub.s32 %v2057, %v2059
    %v2061 = vrot.slane %v2045, %v2060
    %v2063 = vunpack.c.l.s4 1966171168
    %v2064 = vunpack.c.0.s8 %v2063
    %v2065 = vlaneseq
    %v2066 = vshrl.u32 %v2065, 7
    %v2067 = vsub.s32 %v2064, %v2066
    %v2068 = vrot.slane %v2046, %v2067
    %v2070 = vunpack.c.l.s4 1966171168
    %v2071 = vunpack.c.0.s8 %v2070
    %v2072 = vlaneseq
    %v2073 = vshrl.u32 %v2072, 7
    %v2074 = vsub.s32 %v2071, %v2073
    %v2075 = vrot.slane %v2047, %v2074
    %v2076 = vcombine.low %v2054, %v2061
    %v2077 = vcombine.low %v2068, %v2075
    %v2079 = vunpack.c.l.s4 1966171168
    %v2080 = vunpack.c.0.s8 %v2079
    %v2081 = vlaneseq
    %v2082 = vshrl.u32 %v2081, 7
    %v2083 = vsub.s32 %v2080, %v2082
    %v2084 = vrot.slane %v2076, %v2083
    %v2086 = vunpack.c.l.s4 1966171168
    %v2087 = vunpack.c.0.s8 %v2086
    %v2088 = vlaneseq
    %v2089 = vshrl.u32 %v2088, 7
    %v2090 = vsub.s32 %v2087, %v2089
    %v2091 = vrot.slane %v2077, %v2090
    %v2092 = vcombine.low %v2084, %v2091
    %v2093 = vcombine.low %v1004, %v1008
    %v2094 = vcombine.low %v1012, %v1016
    %v2095 = vcombine.low %v1020, %v1024
    %v2096 = vcombine.low %v1028, %v1032
    %v2098 = vunpack.c.l.s4 1966171168
    %v2099 = vunpack.c.0.s8 %v2098
    %v2100 = vlaneseq
    %v2101 = vshrl.u32 %v2100, 7
    %v2102 = vsub.s32 %v2099, %v2101
    %v2103 = vrot.slane %v2093, %v2102
    %v2105 = vunpack.c.l.s4 1966171168
    %v2106 = vunpack.c.0.s8 %v2105
    %v2107 = vlaneseq
    %v2108 = vshrl.u32 %v2107, 7
    %v2109 = vsub.s32 %v2106, %v2108
    %v2110 = vrot.slane %v2094, %v2109
    %v2112 = vunpack.c.l.s4 1966171168
    %v2113 = vunpack.c.0.s8 %v2112
    %v2114 = vlaneseq
    %v2115 = vshrl.u32 %v2114, 7
    %v2116 = vsub.s32 %v2113, %v2115
    %v2117 = vrot.slane %v2095, %v2116
    %v2119 = vunpack.c.l.s4 1966171168
    %v2120 = vunpack.c.0.s8 %v2119
    %v2121 = vlaneseq
    %v2122 = vshrl.u32 %v2121, 7
    %v2123 = vsub.s32 %v2120, %v2122
    %v2124 = vrot.slane %v2096, %v2123
    %v2125 = vcombine.low %v2103, %v2110
    %v2126 = vcombine.low %v2117, %v2124
    %v2128 = vunpack.c.l.s4 1966171168
    %v2129 = vunpack.c.0.s8 %v2128
    %v2130 = vlaneseq
    %v2131 = vshrl.u32 %v2130, 7
    %v2132 = vsub.s32 %v2129, %v2131
    %v2133 = vrot.slane %v2125, %v2132
    %v2135 = vunpack.c.l.s4 1966171168
    %v2136 = vunpack.c.0.s8 %v2135
    %v2137 = vlaneseq
    %v2138 = vshrl.u32 %v2137, 7
    %v2139 = vsub.s32 %v2136, %v2138
    %v2140 = vrot.slane %v2126, %v2139
    %v2141 = vcombine.low %v2133, %v2140
    %v2142 = vcombine.low %v1036, %v1040
    %v2143 = vcombine.low %v1044, %v1048
    %v2144 = vcombine.low %v1052, %v1056
    %v2145 = vcombine.low %v1060, %v1064
    %v2147 = vunpack.c.l.s4 1966171168
    %v2148 = vunpack.c.0.s8 %v2147
    %v2149 = vlaneseq
    %v2150 = vshrl.u32 %v2149, 7
    %v2151 = vsub.s32 %v2148, %v2150
    %v2152 = vrot.slane %v2142, %v2151
    %v2154 = vunpack.c.l.s4 1966171168
    %v2155 = vunpack.c.0.s8 %v2154
    %v2156 = vlaneseq
    %v2157 = vshrl.u32 %v2156, 7
    %v2158 = vsub.s32 %v2155, %v2157
    %v2159 = vrot.slane %v2143, %v2158
    %v2161 = vunpack.c.l.s4 1966171168
    %v2162 = vunpack.c.0.s8 %v2161
    %v2163 = vlaneseq
    %v2164 = vshrl.u32 %v2163, 7
    %v2165 = vsub.s32 %v2162, %v2164
    %v2166 = vrot.slane %v2144, %v2165
    %v2168 = vunpack.c.l.s4 1966171168
    %v2169 = vunpack.c.0.s8 %v2168
    %v2170 = vlaneseq
    %v2171 = vshrl.u32 %v2170, 7
    %v2172 = vsub.s32 %v2169, %v2171
    %v2173 = vrot.slane %v2145, %v2172
    %v2174 = vcombine.low %v2152, %v2159
    %v2175 = vcombine.low %v2166, %v2173
    %v2177 = vunpack.c.l.s4 1966171168
    %v2178 = vunpack.c.0.s8 %v2177
    %v2179 = vlaneseq
    %v2180 = vshrl.u32 %v2179, 7
    %v2181 = vsub.s32 %v2178, %v2180
    %v2182 = vrot.slane %v2174, %v2181
    %v2184 = vunpack.c.l.s4 1966171168
    %v2185 = vunpack.c.0.s8 %v2184
    %v2186 = vlaneseq
    %v2187 = vshrl.u32 %v2186, 7
    %v2188 = vsub.s32 %v2185, %v2187
    %v2189 = vrot.slane %v2175, %v2188
    %v2190 = vcombine.low %v2182, %v2189
    %v2191 = vcombine.low %v1068, %v1072
    %v2192 = vcombine.low %v1076, %v1080
    %v2193 = vcombine.low %v1084, %v1088
    %v2194 = vcombine.low %v1092, %v1096
    %v2196 = vunpack.c.l.s4 1966171168
    %v2197 = vunpack.c.0.s8 %v2196
    %v2198 = vlaneseq
    %v2199 = vshrl.u32 %v2198, 7
    %v2200 = vsub.s32 %v2197, %v2199
    %v2201 = vrot.slane %v2191, %v2200
    %v2203 = vunpack.c.l.s4 1966171168
    %v2204 = vunpack.c.0.s8 %v2203
    %v2205 = vlaneseq
    %v2206 = vshrl.u32 %v2205, 7
    %v2207 = vsub.s32 %v2204, %v2206
    %v2208 = vrot.slane %v2192, %v2207
    %v2210 = vunpack.c.l.s4 1966171168
    %v2211 = vunpack.c.0.s8 %v2210
    %v2212 = vlaneseq
    %v2213 = vshrl.u32 %v2212, 7
    %v2214 = vsub.s32 %v2211, %v2213
    %v2215 = vrot.slane %v2193, %v2214
    %v2217 = vunpack.c.l.s4 1966171168
    %v2218 = vunpack.c.0.s8 %v2217
    %v2219 = vlaneseq
    %v2220 = vshrl.u32 %v2219, 7
    %v2221 = vsub.s32 %v2218, %v2220
    %v2222 = vrot.slane %v2194, %v2221
    %v2223 = vcombine.low %v2201, %v2208
    %v2224 = vcombine.low %v2215, %v2222
    %v2226 = vunpack.c.l.s4 1966171168
    %v2227 = vunpack.c.0.s8 %v2226
    %v2228 = vlaneseq
    %v2229 = vshrl.u32 %v2228, 7
    %v2230 = vsub.s32 %v2227, %v2229
    %v2231 = vrot.slane %v2223, %v2230
    %v2233 = vunpack.c.l.s4 1966171168
    %v2234 = vunpack.c.0.s8 %v2233
    %v2235 = vlaneseq
    %v2236 = vshrl.u32 %v2235, 7
    %v2237 = vsub.s32 %v2234, %v2236
    %v2238 = vrot.slane %v2224, %v2237
    %v2239 = vcombine.low %v2231, %v2238
    %v2240 = vcombine.low %v1100, %v1104
    %v2241 = vcombine.low %v1108, %v1112
    %v2242 = vcombine.low %v1116, %v1120
    %v2243 = vcombine.low %v1124, %v1128
    %v2245 = vunpack.c.l.s4 1966171168
    %v2246 = vunpack.c.0.s8 %v2245
    %v2247 = vlaneseq
    %v2248 = vshrl.u32 %v2247, 7
    %v2249 = vsub.s32 %v2246, %v2248
    %v2250 = vrot.slane %v2240, %v2249
    %v2252 = vunpack.c.l.s4 1966171168
    %v2253 = vunpack.c.0.s8 %v2252
    %v2254 = vlaneseq
    %v2255 = vshrl.u32 %v2254, 7
    %v2256 = vsub.s32 %v2253, %v2255
    %v2257 = vrot.slane %v2241, %v2256
    %v2259 = vunpack.c.l.s4 1966171168
    %v2260 = vunpack.c.0.s8 %v2259
    %v2261 = vlaneseq
    %v2262 = vshrl.u32 %v2261, 7
    %v2263 = vsub.s32 %v2260, %v2262
    %v2264 = vrot.slane %v2242, %v2263
    %v2266 = vunpack.c.l.s4 1966171168
    %v2267 = vunpack.c.0.s8 %v2266
    %v2268 = vlaneseq
    %v2269 = vshrl.u32 %v2268, 7
    %v2270 = vsub.s32 %v2267, %v2269
    %v2271 = vrot.slane %v2243, %v2270
    %v2272 = vcombine.low %v2250, %v2257
    %v2273 = vcombine.low %v2264, %v2271
    %v2275 = vunpack.c.l.s4 1966171168
    %v2276 = vunpack.c.0.s8 %v2275
    %v2277 = vlaneseq
    %v2278 = vshrl.u32 %v2277, 7
    %v2279 = vsub.s32 %v2276, %v2278
    %v2280 = vrot.slane %v2272, %v2279
    %v2282 = vunpack.c.l.s4 1966171168
    %v2283 = vunpack.c.0.s8 %v2282
    %v2284 = vlaneseq
    %v2285 = vshrl.u32 %v2284, 7
    %v2286 = vsub.s32 %v2283, %v2285
    %v2287 = vrot.slane %v2273, %v2286
    %v2288 = vcombine.low %v2280, %v2287
    %v2289 = vcombine.low %v1132, %v1136
    %v2290 = vcombine.low %v1140, %v1144
    %v2291 = vcombine.low %v1148, %v1152
    %v2292 = vcombine.low %v1156, %v1160
    %v2294 = vunpack.c.l.s4 1966171168
    %v2295 = vunpack.c.0.s8 %v2294
    %v2296 = vlaneseq
    %v2297 = vshrl.u32 %v2296, 7
    %v2298 = vsub.s32 %v2295, %v2297
    %v2299 = vrot.slane %v2289, %v2298
    %v2301 = vunpack.c.l.s4 1966171168
    %v2302 = vunpack.c.0.s8 %v2301
    %v2303 = vlaneseq
    %v2304 = vshrl.u32 %v2303, 7
    %v2305 = vsub.s32 %v2302, %v2304
    %v2306 = vrot.slane %v2290, %v2305
    %v2308 = vunpack.c.l.s4 1966171168
    %v2309 = vunpack.c.0.s8 %v2308
    %v2310 = vlaneseq
    %v2311 = vshrl.u32 %v2310, 7
    %v2312 = vsub.s32 %v2309, %v2311
    %v2313 = vrot.slane %v2291, %v2312
    %v2315 = vunpack.c.l.s4 1966171168
    %v2316 = vunpack.c.0.s8 %v2315
    %v2317 = vlaneseq
    %v2318 = vshrl.u32 %v2317, 7
    %v2319 = vsub.s32 %v2316, %v2318
    %v2320 = vrot.slane %v2292, %v2319
    %v2321 = vcombine.low %v2299, %v2306
    %v2322 = vcombine.low %v2313, %v2320
    %v2324 = vunpack.c.l.s4 1966171168
    %v2325 = vunpack.c.0.s8 %v2324
    %v2326 = vlaneseq
    %v2327 = vshrl.u32 %v2326, 7
    %v2328 = vsub.s32 %v2325, %v2327
    %v2329 = vrot.slane %v2321, %v2328
    %v2331 = vunpack.c.l.s4 1966171168
    %v2332 = vunpack.c.0.s8 %v2331
    %v2333 = vlaneseq
    %v2334 = vshrl.u32 %v2333, 7
    %v2335 = vsub.s32 %v2332, %v2334
    %v2336 = vrot.slane %v2322, %v2335
    %v2337 = vcombine.low %v2329, %v2336
    %v2338 = vcombine.low %v1164, %v1168
    %v2339 = vcombine.low %v1172, %v1176
    %v2340 = vcombine.low %v1180, %v1184
    %v2341 = vcombine.low %v1188, %v1192
    %v2343 = vunpack.c.l.s4 1966171168
    %v2344 = vunpack.c.0.s8 %v2343
    %v2345 = vlaneseq
    %v2346 = vshrl.u32 %v2345, 7
    %v2347 = vsub.s32 %v2344, %v2346
    %v2348 = vrot.slane %v2338, %v2347
    %v2350 = vunpack.c.l.s4 1966171168
    %v2351 = vunpack.c.0.s8 %v2350
    %v2352 = vlaneseq
    %v2353 = vshrl.u32 %v2352, 7
    %v2354 = vsub.s32 %v2351, %v2353
    %v2355 = vrot.slane %v2339, %v2354
    %v2357 = vunpack.c.l.s4 1966171168
    %v2358 = vunpack.c.0.s8 %v2357
    %v2359 = vlaneseq
    %v2360 = vshrl.u32 %v2359, 7
    %v2361 = vsub.s32 %v2358, %v2360
    %v2362 = vrot.slane %v2340, %v2361
    %v2364 = vunpack.c.l.s4 1966171168
    %v2365 = vunpack.c.0.s8 %v2364
    %v2366 = vlaneseq
    %v2367 = vshrl.u32 %v2366, 7
    %v2368 = vsub.s32 %v2365, %v2367
    %v2369 = vrot.slane %v2341, %v2368
    %v2370 = vcombine.low %v2348, %v2355
    %v2371 = vcombine.low %v2362, %v2369
    %v2373 = vunpack.c.l.s4 1966171168
    %v2374 = vunpack.c.0.s8 %v2373
    %v2375 = vlaneseq
    %v2376 = vshrl.u32 %v2375, 7
    %v2377 = vsub.s32 %v2374, %v2376
    %v2378 = vrot.slane %v2370, %v2377
    %v2380 = vunpack.c.l.s4 1966171168
    %v2381 = vunpack.c.0.s8 %v2380
    %v2382 = vlaneseq
    %v2383 = vshrl.u32 %v2382, 7
    %v2384 = vsub.s32 %v2381, %v2383
    %v2385 = vrot.slane %v2371, %v2384
    %v2386 = vcombine.low %v2378, %v2385
    %v2387 = vcombine.low %v1196, %v1200
    %v2388 = vcombine.low %v1204, %v1208
    %v2389 = vcombine.low %v1212, %v1216
    %v2390 = vcombine.low %v1220, %v1224
    %v2392 = vunpack.c.l.s4 1966171168
    %v2393 = vunpack.c.0.s8 %v2392
    %v2394 = vlaneseq
    %v2395 = vshrl.u32 %v2394, 7
    %v2396 = vsub.s32 %v2393, %v2395
    %v2397 = vrot.slane %v2387, %v2396
    %v2399 = vunpack.c.l.s4 1966171168
    %v2400 = vunpack.c.0.s8 %v2399
    %v2401 = vlaneseq
    %v2402 = vshrl.u32 %v2401, 7
    %v2403 = vsub.s32 %v2400, %v2402
    %v2404 = vrot.slane %v2388, %v2403
    %v2406 = vunpack.c.l.s4 1966171168
    %v2407 = vunpack.c.0.s8 %v2406
    %v2408 = vlaneseq
    %v2409 = vshrl.u32 %v2408, 7
    %v2410 = vsub.s32 %v2407, %v2409
    %v2411 = vrot.slane %v2389, %v2410
    %v2413 = vunpack.c.l.s4 1966171168
    %v2414 = vunpack.c.0.s8 %v2413
    %v2415 = vlaneseq
    %v2416 = vshrl.u32 %v2415, 7
    %v2417 = vsub.s32 %v2414, %v2416
    %v2418 = vrot.slane %v2390, %v2417
    %v2419 = vcombine.low %v2397, %v2404
    %v2420 = vcombine.low %v2411, %v2418
    %v2422 = vunpack.c.l.s4 1966171168
    %v2423 = vunpack.c.0.s8 %v2422
    %v2424 = vlaneseq
    %v2425 = vshrl.u32 %v2424, 7
    %v2426 = vsub.s32 %v2423, %v2425
    %v2427 = vrot.slane %v2419, %v2426
    %v2429 = vunpack.c.l.s4 1966171168
    %v2430 = vunpack.c.0.s8 %v2429
    %v2431 = vlaneseq
    %v2432 = vshrl.u32 %v2431, 7
    %v2433 = vsub.s32 %v2430, %v2432
    %v2434 = vrot.slane %v2420, %v2433
    %v2435 = vcombine.low %v2427, %v2434
    %v2436 = vcombine.low %v1228, %v1232
    %v2437 = vcombine.low %v1236, %v1240
    %v2438 = vcombine.low %v1244, %v1248
    %v2439 = vcombine.low %v1252, %v1256
    %v2441 = vunpack.c.l.s4 1966171168
    %v2442 = vunpack.c.0.s8 %v2441
    %v2443 = vlaneseq
    %v2444 = vshrl.u32 %v2443, 7
    %v2445 = vsub.s32 %v2442, %v2444
    %v2446 = vrot.slane %v2436, %v2445
    %v2448 = vunpack.c.l.s4 1966171168
    %v2449 = vunpack.c.0.s8 %v2448
    %v2450 = vlaneseq
    %v2451 = vshrl.u32 %v2450, 7
    %v2452 = vsub.s32 %v2449, %v2451
    %v2453 = vrot.slane %v2437, %v2452
    %v2455 = vunpack.c.l.s4 1966171168
    %v2456 = vunpack.c.0.s8 %v2455
    %v2457 = vlaneseq
    %v2458 = vshrl.u32 %v2457, 7
    %v2459 = vsub.s32 %v2456, %v2458
    %v2460 = vrot.slane %v2438, %v2459
    %v2462 = vunpack.c.l.s4 1966171168
    %v2463 = vunpack.c.0.s8 %v2462
    %v2464 = vlaneseq
    %v2465 = vshrl.u32 %v2464, 7
    %v2466 = vsub.s32 %v2463, %v2465
    %v2467 = vrot.slane %v2439, %v2466
    %v2468 = vcombine.low %v2446, %v2453
    %v2469 = vcombine.low %v2460, %v2467
    %v2471 = vunpack.c.l.s4 1966171168
    %v2472 = vunpack.c.0.s8 %v2471
    %v2473 = vlaneseq
    %v2474 = vshrl.u32 %v2473, 7
    %v2475 = vsub.s32 %v2472, %v2474
    %v2476 = vrot.slane %v2468, %v2475
    %v2478 = vunpack.c.l.s4 1966171168
    %v2479 = vunpack.c.0.s8 %v2478
    %v2480 = vlaneseq
    %v2481 = vshrl.u32 %v2480, 7
    %v2482 = vsub.s32 %v2479, %v2481
    %v2483 = vrot.slane %v2469, %v2482
    %v2484 = vcombine.low %v2476, %v2483
    %v2485 = vcombine.low %v1260, %v1264
    %v2486 = vcombine.low %v1268, %v1272
    %v2487 = vcombine.low %v1276, %v1280
    %v2488 = vcombine.low %v1284, %v1288
    %v2490 = vunpack.c.l.s4 1966171168
    %v2491 = vunpack.c.0.s8 %v2490
    %v2492 = vlaneseq
    %v2493 = vshrl.u32 %v2492, 7
    %v2494 = vsub.s32 %v2491, %v2493
    %v2495 = vrot.slane %v2485, %v2494
    %v2497 = vunpack.c.l.s4 1966171168
    %v2498 = vunpack.c.0.s8 %v2497
    %v2499 = vlaneseq
    %v2500 = vshrl.u32 %v2499, 7
    %v2501 = vsub.s32 %v2498, %v2500
    %v2502 = vrot.slane %v2486, %v2501
    %v2504 = vunpack.c.l.s4 1966171168
    %v2505 = vunpack.c.0.s8 %v2504
    %v2506 = vlaneseq
    %v2507 = vshrl.u32 %v2506, 7
    %v2508 = vsub.s32 %v2505, %v2507
    %v2509 = vrot.slane %v2487, %v2508
    %v2511 = vunpack.c.l.s4 1966171168
    %v2512 = vunpack.c.0.s8 %v2511
    %v2513 = vlaneseq
    %v2514 = vshrl.u32 %v2513, 7
    %v2515 = vsub.s32 %v2512, %v2514
    %v2516 = vrot.slane %v2488, %v2515
    %v2517 = vcombine.low %v2495, %v2502
    %v2518 = vcombine.low %v2509, %v2516
    %v2520 = vunpack.c.l.s4 1966171168
    %v2521 = vunpack.c.0.s8 %v2520
    %v2522 = vlaneseq
    %v2523 = vshrl.u32 %v2522, 7
    %v2524 = vsub.s32 %v2521, %v2523
    %v2525 = vrot.slane %v2517, %v2524
    %v2527 = vunpack.c.l.s4 1966171168
    %v2528 = vunpack.c.0.s8 %v2527
    %v2529 = vlaneseq
    %v2530 = vshrl.u32 %v2529, 7
    %v2531 = vsub.s32 %v2528, %v2530
    %v2532 = vrot.slane %v2518, %v2531
    %v2533 = vcombine.low %v2525, %v2532
    %v2534 = vcombine.low %v1292, %v1296
    %v2535 = vcombine.low %v1300, %v1304
    %v2536 = vcombine.low %v1308, %v1312
    %v2537 = vcombine.low %v1316, %v1320
    %v2539 = vunpack.c.l.s4 1966171168
    %v2540 = vunpack.c.0.s8 %v2539
    %v2541 = vlaneseq
    %v2542 = vshrl.u32 %v2541, 7
    %v2543 = vsub.s32 %v2540, %v2542
    %v2544 = vrot.slane %v2534, %v2543
    %v2546 = vunpack.c.l.s4 1966171168
    %v2547 = vunpack.c.0.s8 %v2546
    %v2548 = vlaneseq
    %v2549 = vshrl.u32 %v2548, 7
    %v2550 = vsub.s32 %v2547, %v2549
    %v2551 = vrot.slane %v2535, %v2550
    %v2553 = vunpack.c.l.s4 1966171168
    %v2554 = vunpack.c.0.s8 %v2553
    %v2555 = vlaneseq
    %v2556 = vshrl.u32 %v2555, 7
    %v2557 = vsub.s32 %v2554, %v2556
    %v2558 = vrot.slane %v2536, %v2557
    %v2560 = vunpack.c.l.s4 1966171168
    %v2561 = vunpack.c.0.s8 %v2560
    %v2562 = vlaneseq
    %v2563 = vshrl.u32 %v2562, 7
    %v2564 = vsub.s32 %v2561, %v2563
    %v2565 = vrot.slane %v2537, %v2564
    %v2566 = vcombine.low %v2544, %v2551
    %v2567 = vcombine.low %v2558, %v2565
    %v2569 = vunpack.c.l.s4 1966171168
    %v2570 = vunpack.c.0.s8 %v2569
    %v2571 = vlaneseq
    %v2572 = vshrl.u32 %v2571, 7
    %v2573 = vsub.s32 %v2570, %v2572
    %v2574 = vrot.slane %v2566, %v2573
    %v2576 = vunpack.c.l.s4 1966171168
    %v2577 = vunpack.c.0.s8 %v2576
    %v2578 = vlaneseq
    %v2579 = vshrl.u32 %v2578, 7
    %v2580 = vsub.s32 %v2577, %v2579
    %v2581 = vrot.slane %v2567, %v2580
    %v2582 = vcombine.low %v2574, %v2581
    %v2583 = vcombine.low %v1324, %v1328
    %v2584 = vcombine.low %v1332, %v1336
    %v2585 = vcombine.low %v1340, %v1344
    %v2586 = vcombine.low %v1348, %v1352
    %v2588 = vunpack.c.l.s4 1966171168
    %v2589 = vunpack.c.0.s8 %v2588
    %v2590 = vlaneseq
    %v2591 = vshrl.u32 %v2590, 7
    %v2592 = vsub.s32 %v2589, %v2591
    %v2593 = vrot.slane %v2583, %v2592
    %v2595 = vunpack.c.l.s4 1966171168
    %v2596 = vunpack.c.0.s8 %v2595
    %v2597 = vlaneseq
    %v2598 = vshrl.u32 %v2597, 7
    %v2599 = vsub.s32 %v2596, %v2598
    %v2600 = vrot.slane %v2584, %v2599
    %v2602 = vunpack.c.l.s4 1966171168
    %v2603 = vunpack.c.0.s8 %v2602
    %v2604 = vlaneseq
    %v2605 = vshrl.u32 %v2604, 7
    %v2606 = vsub.s32 %v2603, %v2605
    %v2607 = vrot.slane %v2585, %v2606
    %v2609 = vunpack.c.l.s4 1966171168
    %v2610 = vunpack.c.0.s8 %v2609
    %v2611 = vlaneseq
    %v2612 = vshrl.u32 %v2611, 7
    %v2613 = vsub.s32 %v2610, %v2612
    %v2614 = vrot.slane %v2586, %v2613
    %v2615 = vcombine.low %v2593, %v2600
    %v2616 = vcombine.low %v2607, %v2614
    %v2618 = vunpack.c.l.s4 1966171168
    %v2619 = vunpack.c.0.s8 %v2618
    %v2620 = vlaneseq
    %v2621 = vshrl.u32 %v2620, 7
    %v2622 = vsub.s32 %v2619, %v2621
    %v2623 = vrot.slane %v2615, %v2622
    %v2625 = vunpack.c.l.s4 1966171168
    %v2626 = vunpack.c.0.s8 %v2625
    %v2627 = vlaneseq
    %v2628 = vshrl.u32 %v2627, 7
    %v2629 = vsub.s32 %v2626, %v2628
    %v2630 = vrot.slane %v2616, %v2629
    %v2631 = vcombine.low %v2623, %v2630
    %v2632 = vcombine.low %v1356, %v1360
    %v2633 = vcombine.low %v1364, %v1368
    %v2634 = vcombine.low %v1372, %v1376
    %v2635 = vcombine.low %v1380, %v1384
    %v2637 = vunpack.c.l.s4 1966171168
    %v2638 = vunpack.c.0.s8 %v2637
    %v2639 = vlaneseq
    %v2640 = vshrl.u32 %v2639, 7
    %v2641 = vsub.s32 %v2638, %v2640
    %v2642 = vrot.slane %v2632, %v2641
    %v2644 = vunpack.c.l.s4 1966171168
    %v2645 = vunpack.c.0.s8 %v2644
    %v2646 = vlaneseq
    %v2647 = vshrl.u32 %v2646, 7
    %v2648 = vsub.s32 %v2645, %v2647
    %v2649 = vrot.slane %v2633, %v2648
    %v2651 = vunpack.c.l.s4 1966171168
    %v2652 = vunpack.c.0.s8 %v2651
    %v2653 = vlaneseq
    %v2654 = vshrl.u32 %v2653, 7
    %v2655 = vsub.s32 %v2652, %v2654
    %v2656 = vrot.slane %v2634, %v2655
    %v2658 = vunpack.c.l.s4 1966171168
    %v2659 = vunpack.c.0.s8 %v2658
    %v2660 = vlaneseq
    %v2661 = vshrl.u32 %v2660, 7
    %v2662 = vsub.s32 %v2659, %v2661
    %v2663 = vrot.slane %v2635, %v2662
    %v2664 = vcombine.low %v2642, %v2649
    %v2665 = vcombine.low %v2656, %v2663
    %v2667 = vunpack.c.l.s4 1966171168
    %v2668 = vunpack.c.0.s8 %v2667
    %v2669 = vlaneseq
    %v2670 = vshrl.u32 %v2669, 7
    %v2671 = vsub.s32 %v2668, %v2670
    %v2672 = vrot.slane %v2664, %v2671
    %v2674 = vunpack.c.l.s4 1966171168
    %v2675 = vunpack.c.0.s8 %v2674
    %v2676 = vlaneseq
    %v2677 = vshrl.u32 %v2676, 7
    %v2678 = vsub.s32 %v2675, %v2677
    %v2679 = vrot.slane %v2665, %v2678
    %v2680 = vcombine.low %v2672, %v2679
    %v2681 = vcombine.low %v1388, %v1392
    %v2682 = vcombine.low %v1396, %v1400
    %v2683 = vcombine.low %v1404, %v1408
    %v2684 = vcombine.low %v1412, %v1416
    %v2686 = vunpack.c.l.s4 1966171168
    %v2687 = vunpack.c.0.s8 %v2686
    %v2688 = vlaneseq
    %v2689 = vshrl.u32 %v2688, 7
    %v2690 = vsub.s32 %v2687, %v2689
    %v2691 = vrot.slane %v2681, %v2690
    %v2693 = vunpack.c.l.s4 1966171168
    %v2694 = vunpack.c.0.s8 %v2693
    %v2695 = vlaneseq
    %v2696 = vshrl.u32 %v2695, 7
    %v2697 = vsub.s32 %v2694, %v2696
    %v2698 = vrot.slane %v2682, %v2697
    %v2700 = vunpack.c.l.s4 1966171168
    %v2701 = vunpack.c.0.s8 %v2700
    %v2702 = vlaneseq
    %v2703 = vshrl.u32 %v2702, 7
    %v2704 = vsub.s32 %v2701, %v2703
    %v2705 = vrot.slane %v2683, %v2704
    %v2707 = vunpack.c.l.s4 1966171168
    %v2708 = vunpack.c.0.s8 %v2707
    %v2709 = vlaneseq
    %v2710 = vshrl.u32 %v2709, 7
    %v2711 = vsub.s32 %v2708, %v2710
    %v2712 = vrot.slane %v2684, %v2711
    %v2713 = vcombine.low %v2691, %v2698
    %v2714 = vcombine.low %v2705, %v2712
    %v2716 = vunpack.c.l.s4 1966171168
    %v2717 = vunpack.c.0.s8 %v2716
    %v2718 = vlaneseq
    %v2719 = vshrl.u32 %v2718, 7
    %v2720 = vsub.s32 %v2717, %v2719
    %v2721 = vrot.slane %v2713, %v2720
    %v2723 = vunpack.c.l.s4 1966171168
    %v2724 = vunpack.c.0.s8 %v2723
    %v2725 = vlaneseq
    %v2726 = vshrl.u32 %v2725, 7
    %v2727 = vsub.s32 %v2724, %v2726
    %v2728 = vrot.slane %v2714, %v2727
    %v2729 = vcombine.low %v2721, %v2728
    %v2730 = vcombine.low %v1420, %v1424
    %v2731 = vcombine.low %v1428, %v1432
    %v2732 = vcombine.low %v1436, %v1440
    %v2733 = vcombine.low %v1444, %v1448
    %v2735 = vunpack.c.l.s4 1966171168
    %v2736 = vunpack.c.0.s8 %v2735
    %v2737 = vlaneseq
    %v2738 = vshrl.u32 %v2737, 7
    %v2739 = vsub.s32 %v2736, %v2738
    %v2740 = vrot.slane %v2730, %v2739
    %v2742 = vunpack.c.l.s4 1966171168
    %v2743 = vunpack.c.0.s8 %v2742
    %v2744 = vlaneseq
    %v2745 = vshrl.u32 %v2744, 7
    %v2746 = vsub.s32 %v2743, %v2745
    %v2747 = vrot.slane %v2731, %v2746
    %v2749 = vunpack.c.l.s4 1966171168
    %v2750 = vunpack.c.0.s8 %v2749
    %v2751 = vlaneseq
    %v2752 = vshrl.u32 %v2751, 7
    %v2753 = vsub.s32 %v2750, %v2752
    %v2754 = vrot.slane %v2732, %v2753
    %v2756 = vunpack.c.l.s4 1966171168
    %v2757 = vunpack.c.0.s8 %v2756
    %v2758 = vlaneseq
    %v2759 = vshrl.u32 %v2758, 7
    %v2760 = vsub.s32 %v2757, %v2759
    %v2761 = vrot.slane %v2733, %v2760
    %v2762 = vcombine.low %v2740, %v2747
    %v2763 = vcombine.low %v2754, %v2761
    %v2765 = vunpack.c.l.s4 1966171168
    %v2766 = vunpack.c.0.s8 %v2765
    %v2767 = vlaneseq
    %v2768 = vshrl.u32 %v2767, 7
    %v2769 = vsub.s32 %v2766, %v2768
    %v2770 = vrot.slane %v2762, %v2769
    %v2772 = vunpack.c.l.s4 1966171168
    %v2773 = vunpack.c.0.s8 %v2772
    %v2774 = vlaneseq
    %v2775 = vshrl.u32 %v2774, 7
    %v2776 = vsub.s32 %v2773, %v2775
    %v2777 = vrot.slane %v2763, %v2776
    %v2778 = vcombine.low %v2770, %v2777
    %v2779 = vcombine.low %v1452, %v1456
    %v2780 = vcombine.low %v1460, %v1464
    %v2781 = vcombine.low %v1468, %v1472
    %v2782 = vcombine.low %v1476, %v1480
    %v2784 = vunpack.c.l.s4 1966171168
    %v2785 = vunpack.c.0.s8 %v2784
    %v2786 = vlaneseq
    %v2787 = vshrl.u32 %v2786, 7
    %v2788 = vsub.s32 %v2785, %v2787
    %v2789 = vrot.slane %v2779, %v2788
    %v2791 = vunpack.c.l.s4 1966171168
    %v2792 = vunpack.c.0.s8 %v2791
    %v2793 = vlaneseq
    %v2794 = vshrl.u32 %v2793, 7
    %v2795 = vsub.s32 %v2792, %v2794
    %v2796 = vrot.slane %v2780, %v2795
    %v2798 = vunpack.c.l.s4 1966171168
    %v2799 = vunpack.c.0.s8 %v2798
    %v2800 = vlaneseq
    %v2801 = vshrl.u32 %v2800, 7
    %v2802 = vsub.s32 %v2799, %v2801
    %v2803 = vrot.slane %v2781, %v2802
    %v2805 = vunpack.c.l.s4 1966171168
    %v2806 = vunpack.c.0.s8 %v2805
    %v2807 = vlaneseq
    %v2808 = vshrl.u32 %v2807, 7
    %v2809 = vsub.s32 %v2806, %v2808
    %v2810 = vrot.slane %v2782, %v2809
    %v2811 = vcombine.low %v2789, %v2796
    %v2812 = vcombine.low %v2803, %v2810
    %v2814 = vunpack.c.l.s4 1966171168
    %v2815 = vunpack.c.0.s8 %v2814
    %v2816 = vlaneseq
    %v2817 = vshrl.u32 %v2816, 7
    %v2818 = vsub.s32 %v2815, %v2817
    %v2819 = vrot.slane %v2811, %v2818
    %v2821 = vunpack.c.l.s4 1966171168
    %v2822 = vunpack.c.0.s8 %v2821
    %v2823 = vlaneseq
    %v2824 = vshrl.u32 %v2823, 7
    %v2825 = vsub.s32 %v2822, %v2824
    %v2826 = vrot.slane %v2812, %v2825
    %v2827 = vcombine.low %v2819, %v2826
    %v2828 = vcombine.low %v1484, %v1488
    %v2829 = vcombine.low %v1492, %v1496
    %v2830 = vcombine.low %v1500, %v1504
    %v2831 = vcombine.low %v1508, %v1512
    %v2833 = vunpack.c.l.s4 1966171168
    %v2834 = vunpack.c.0.s8 %v2833
    %v2835 = vlaneseq
    %v2836 = vshrl.u32 %v2835, 7
    %v2837 = vsub.s32 %v2834, %v2836
    %v2838 = vrot.slane %v2828, %v2837
    %v2840 = vunpack.c.l.s4 1966171168
    %v2841 = vunpack.c.0.s8 %v2840
    %v2842 = vlaneseq
    %v2843 = vshrl.u32 %v2842, 7
    %v2844 = vsub.s32 %v2841, %v2843
    %v2845 = vrot.slane %v2829, %v2844
    %v2847 = vunpack.c.l.s4 1966171168
    %v2848 = vunpack.c.0.s8 %v2847
    %v2849 = vlaneseq
    %v2850 = vshrl.u32 %v2849, 7
    %v2851 = vsub.s32 %v2848, %v2850
    %v2852 = vrot.slane %v2830, %v2851
    %v2854 = vunpack.c.l.s4 1966171168
    %v2855 = vunpack.c.0.s8 %v2854
    %v2856 = vlaneseq
    %v2857 = vshrl.u32 %v2856, 7
    %v2858 = vsub.s32 %v2855, %v2857
    %v2859 = vrot.slane %v2831, %v2858
    %v2860 = vcombine.low %v2838, %v2845
    %v2861 = vcombine.low %v2852, %v2859
    %v2863 = vunpack.c.l.s4 1966171168
    %v2864 = vunpack.c.0.s8 %v2863
    %v2865 = vlaneseq
    %v2866 = vshrl.u32 %v2865, 7
    %v2867 = vsub.s32 %v2864, %v2866
    %v2868 = vrot.slane %v2860, %v2867
    %v2870 = vunpack.c.l.s4 1966171168
    %v2871 = vunpack.c.0.s8 %v2870
    %v2872 = vlaneseq
    %v2873 = vshrl.u32 %v2872, 7
    %v2874 = vsub.s32 %v2871, %v2873
    %v2875 = vrot.slane %v2861, %v2874
    %v2876 = vcombine.low %v2868, %v2875
    %v2877 = vcombine.low %v1516, %v1520
    %v2878 = vcombine.low %v1524, %v1528
    %v2879 = vcombine.low %v1532, %v1536
    %v2880 = vcombine.low %v1540, %v1544
    %v2882 = vunpack.c.l.s4 1966171168
    %v2883 = vunpack.c.0.s8 %v2882
    %v2884 = vlaneseq
    %v2885 = vshrl.u32 %v2884, 7
    %v2886 = vsub.s32 %v2883, %v2885
    %v2887 = vrot.slane %v2877, %v2886
    %v2889 = vunpack.c.l.s4 1966171168
    %v2890 = vunpack.c.0.s8 %v2889
    %v2891 = vlaneseq
    %v2892 = vshrl.u32 %v2891, 7
    %v2893 = vsub.s32 %v2890, %v2892
    %v2894 = vrot.slane %v2878, %v2893
    %v2896 = vunpack.c.l.s4 1966171168
    %v2897 = vunpack.c.0.s8 %v2896
    %v2898 = vlaneseq
    %v2899 = vshrl.u32 %v2898, 7
    %v2900 = vsub.s32 %v2897, %v2899
    %v2901 = vrot.slane %v2879, %v2900
    %v2903 = vunpack.c.l.s4 1966171168
    %v2904 = vunpack.c.0.s8 %v2903
    %v2905 = vlaneseq
    %v2906 = vshrl.u32 %v2905, 7
    %v2907 = vsub.s32 %v2904, %v2906
    %v2908 = vrot.slane %v2880, %v2907
    %v2909 = vcombine.low %v2887, %v2894
    %v2910 = vcombine.low %v2901, %v2908
    %v2912 = vunpack.c.l.s4 1966171168
    %v2913 = vunpack.c.0.s8 %v2912
    %v2914 = vlaneseq
    %v2915 = vshrl.u32 %v2914, 7
    %v2916 = vsub.s32 %v2913, %v2915
    %v2917 = vrot.slane %v2909, %v2916
    %v2919 = vunpack.c.l.s4 1966171168
    %v2920 = vunpack.c.0.s8 %v2919
    %v2921 = vlaneseq
    %v2922 = vshrl.u32 %v2921, 7
    %v2923 = vsub.s32 %v2920, %v2922
    %v2924 = vrot.slane %v2910, %v2923
    %v2925 = vcombine.low %v2917, %v2924
    %v2926 = vcombine.low %v1548, %v1552
    %v2927 = vcombine.low %v1556, %v1560
    %v2928 = vcombine.low %v1564, %v1568
    %v2929 = vcombine.low %v1572, %v1576
    %v2931 = vunpack.c.l.s4 1966171168
    %v2932 = vunpack.c.0.s8 %v2931
    %v2933 = vlaneseq
    %v2934 = vshrl.u32 %v2933, 7
    %v2935 = vsub.s32 %v2932, %v2934
    %v2936 = vrot.slane %v2926, %v2935
    %v2938 = vunpack.c.l.s4 1966171168
    %v2939 = vunpack.c.0.s8 %v2938
    %v2940 = vlaneseq
    %v2941 = vshrl.u32 %v2940, 7
    %v2942 = vsub.s32 %v2939, %v2941
    %v2943 = vrot.slane %v2927, %v2942
    %v2945 = vunpack.c.l.s4 1966171168
    %v2946 = vunpack.c.0.s8 %v2945
    %v2947 = vlaneseq
    %v2948 = vshrl.u32 %v2947, 7
    %v2949 = vsub.s32 %v2946, %v2948
    %v2950 = vrot.slane %v2928, %v2949
    %v2952 = vunpack.c.l.s4 1966171168
    %v2953 = vunpack.c.0.s8 %v2952
    %v2954 = vlaneseq
    %v2955 = vshrl.u32 %v2954, 7
    %v2956 = vsub.s32 %v2953, %v2955
    %v2957 = vrot.slane %v2929, %v2956
    %v2958 = vcombine.low %v2936, %v2943
    %v2959 = vcombine.low %v2950, %v2957
    %v2961 = vunpack.c.l.s4 1966171168
    %v2962 = vunpack.c.0.s8 %v2961
    %v2963 = vlaneseq
    %v2964 = vshrl.u32 %v2963, 7
    %v2965 = vsub.s32 %v2962, %v2964
    %v2966 = vrot.slane %v2958, %v2965
    %v2968 = vunpack.c.l.s4 1966171168
    %v2969 = vunpack.c.0.s8 %v2968
    %v2970 = vlaneseq
    %v2971 = vshrl.u32 %v2970, 7
    %v2972 = vsub.s32 %v2969, %v2971
    %v2973 = vrot.slane %v2959, %v2972
    %v2974 = vcombine.low %v2966, %v2973
    %v2975 = vcombine.low %v1580, %v1584
    %v2976 = vcombine.low %v1588, %v1592
    %v2977 = vcombine.low %v1596, %v1600
    %v2978 = vcombine.low %v1604, %v1608
    %v2980 = vunpack.c.l.s4 1966171168
    %v2981 = vunpack.c.0.s8 %v2980
    %v2982 = vlaneseq
    %v2983 = vshrl.u32 %v2982, 7
    %v2984 = vsub.s32 %v2981, %v2983
    %v2985 = vrot.slane %v2975, %v2984
    %v2987 = vunpack.c.l.s4 1966171168
    %v2988 = vunpack.c.0.s8 %v2987
    %v2989 = vlaneseq
    %v2990 = vshrl.u32 %v2989, 7
    %v2991 = vsub.s32 %v2988, %v2990
    %v2992 = vrot.slane %v2976, %v2991
    %v2994 = vunpack.c.l.s4 1966171168
    %v2995 = vunpack.c.0.s8 %v2994
    %v2996 = vlaneseq
    %v2997 = vshrl.u32 %v2996, 7
    %v2998 = vsub.s32 %v2995, %v2997
    %v2999 = vrot.slane %v2977, %v2998
    %v3001 = vunpack.c.l.s4 1966171168
    %v3002 = vunpack.c.0.s8 %v3001
    %v3003 = vlaneseq
    %v3004 = vshrl.u32 %v3003, 7
    %v3005 = vsub.s32 %v3002, %v3004
    %v3006 = vrot.slane %v2978, %v3005
    %v3007 = vcombine.low %v2985, %v2992
    %v3008 = vcombine.low %v2999, %v3006
    %v3010 = vunpack.c.l.s4 1966171168
    %v3011 = vunpack.c.0.s8 %v3010
    %v3012 = vlaneseq
    %v3013 = vshrl.u32 %v3012, 7
    %v3014 = vsub.s32 %v3011, %v3013
    %v3015 = vrot.slane %v3007, %v3014
    %v3017 = vunpack.c.l.s4 1966171168
    %v3018 = vunpack.c.0.s8 %v3017
    %v3019 = vlaneseq
    %v3020 = vshrl.u32 %v3019, 7
    %v3021 = vsub.s32 %v3018, %v3020
    %v3022 = vrot.slane %v3008, %v3021
    %v3023 = vcombine.low %v3015, %v3022
    %v3024 = vcombine.low %v1612, %v1616
    %v3025 = vcombine.low %v1620, %v1624
    %v3026 = vcombine.low %v1628, %v1632
    %v3027 = vcombine.low %v1636, %v1640
    %v3029 = vunpack.c.l.s4 1966171168
    %v3030 = vunpack.c.0.s8 %v3029
    %v3031 = vlaneseq
    %v3032 = vshrl.u32 %v3031, 7
    %v3033 = vsub.s32 %v3030, %v3032
    %v3034 = vrot.slane %v3024, %v3033
    %v3036 = vunpack.c.l.s4 1966171168
    %v3037 = vunpack.c.0.s8 %v3036
    %v3038 = vlaneseq
    %v3039 = vshrl.u32 %v3038, 7
    %v3040 = vsub.s32 %v3037, %v3039
    %v3041 = vrot.slane %v3025, %v3040
    %v3043 = vunpack.c.l.s4 1966171168
    %v3044 = vunpack.c.0.s8 %v3043
    %v3045 = vlaneseq
    %v3046 = vshrl.u32 %v3045, 7
    %v3047 = vsub.s32 %v3044, %v3046
    %v3048 = vrot.slane %v3026, %v3047
    %v3050 = vunpack.c.l.s4 1966171168
    %v3051 = vunpack.c.0.s8 %v3050
    %v3052 = vlaneseq
    %v3053 = vshrl.u32 %v3052, 7
    %v3054 = vsub.s32 %v3051, %v3053
    %v3055 = vrot.slane %v3027, %v3054
    %v3056 = vcombine.low %v3034, %v3041
    %v3057 = vcombine.low %v3048, %v3055
    %v3059 = vunpack.c.l.s4 1966171168
    %v3060 = vunpack.c.0.s8 %v3059
    %v3061 = vlaneseq
    %v3062 = vshrl.u32 %v3061, 7
    %v3063 = vsub.s32 %v3060, %v3062
    %v3064 = vrot.slane %v3056, %v3063
    %v3066 = vunpack.c.l.s4 1966171168
    %v3067 = vunpack.c.0.s8 %v3066
    %v3068 = vlaneseq
    %v3069 = vshrl.u32 %v3068, 7
    %v3070 = vsub.s32 %v3067, %v3069
    %v3071 = vrot.slane %v3057, %v3070
    %v3072 = vcombine.low %v3064, %v3071
    %v3073 = vcombine.low %v1644, %v1648
    %v3074 = vcombine.low %v1652, %v1656
    %v3075 = vcombine.low %v1660, %v1664
    %v3076 = vcombine.low %v1668, %v1672
    %v3078 = vunpack.c.l.s4 1966171168
    %v3079 = vunpack.c.0.s8 %v3078
    %v3080 = vlaneseq
    %v3081 = vshrl.u32 %v3080, 7
    %v3082 = vsub.s32 %v3079, %v3081
    %v3083 = vrot.slane %v3073, %v3082
    %v3085 = vunpack.c.l.s4 1966171168
    %v3086 = vunpack.c.0.s8 %v3085
    %v3087 = vlaneseq
    %v3088 = vshrl.u32 %v3087, 7
    %v3089 = vsub.s32 %v3086, %v3088
    %v3090 = vrot.slane %v3074, %v3089
    %v3092 = vunpack.c.l.s4 1966171168
    %v3093 = vunpack.c.0.s8 %v3092
    %v3094 = vlaneseq
    %v3095 = vshrl.u32 %v3094, 7
    %v3096 = vsub.s32 %v3093, %v3095
    %v3097 = vrot.slane %v3075, %v3096
    %v3099 = vunpack.c.l.s4 1966171168
    %v3100 = vunpack.c.0.s8 %v3099
    %v3101 = vlaneseq
    %v3102 = vshrl.u32 %v3101, 7
    %v3103 = vsub.s32 %v3100, %v3102
    %v3104 = vrot.slane %v3076, %v3103
    %v3105 = vcombine.low %v3083, %v3090
    %v3106 = vcombine.low %v3097, %v3104
    %v3108 = vunpack.c.l.s4 1966171168
    %v3109 = vunpack.c.0.s8 %v3108
    %v3110 = vlaneseq
    %v3111 = vshrl.u32 %v3110, 7
    %v3112 = vsub.s32 %v3109, %v3111
    %v3113 = vrot.slane %v3105, %v3112
    %v3115 = vunpack.c.l.s4 1966171168
    %v3116 = vunpack.c.0.s8 %v3115
    %v3117 = vlaneseq
    %v3118 = vshrl.u32 %v3117, 7
    %v3119 = vsub.s32 %v3116, %v3118
    %v3120 = vrot.slane %v3106, %v3119
    %v3121 = vcombine.low %v3113, %v3120
    %v3122 = vcombine.low %v1676, %v1680
    %v3123 = vcombine.low %v1684, %v1688
    %v3124 = vcombine.low %v1692, %v1696
    %v3125 = vcombine.low %v1700, %v1704
    %v3127 = vunpack.c.l.s4 1966171168
    %v3128 = vunpack.c.0.s8 %v3127
    %v3129 = vlaneseq
    %v3130 = vshrl.u32 %v3129, 7
    %v3131 = vsub.s32 %v3128, %v3130
    %v3132 = vrot.slane %v3122, %v3131
    %v3134 = vunpack.c.l.s4 1966171168
    %v3135 = vunpack.c.0.s8 %v3134
    %v3136 = vlaneseq
    %v3137 = vshrl.u32 %v3136, 7
    %v3138 = vsub.s32 %v3135, %v3137
    %v3139 = vrot.slane %v3123, %v3138
    %v3141 = vunpack.c.l.s4 1966171168
    %v3142 = vunpack.c.0.s8 %v3141
    %v3143 = vlaneseq
    %v3144 = vshrl.u32 %v3143, 7
    %v3145 = vsub.s32 %v3142, %v3144
    %v3146 = vrot.slane %v3124, %v3145
    %v3148 = vunpack.c.l.s4 1966171168
    %v3149 = vunpack.c.0.s8 %v3148
    %v3150 = vlaneseq
    %v3151 = vshrl.u32 %v3150, 7
    %v3152 = vsub.s32 %v3149, %v3151
    %v3153 = vrot.slane %v3125, %v3152
    %v3154 = vcombine.low %v3132, %v3139
    %v3155 = vcombine.low %v3146, %v3153
    %v3157 = vunpack.c.l.s4 1966171168
    %v3158 = vunpack.c.0.s8 %v3157
    %v3159 = vlaneseq
    %v3160 = vshrl.u32 %v3159, 7
    %v3161 = vsub.s32 %v3158, %v3160
    %v3162 = vrot.slane %v3154, %v3161
    %v3164 = vunpack.c.l.s4 1966171168
    %v3165 = vunpack.c.0.s8 %v3164
    %v3166 = vlaneseq
    %v3167 = vshrl.u32 %v3166, 7
    %v3168 = vsub.s32 %v3165, %v3167
    %v3169 = vrot.slane %v3155, %v3168
    %v3170 = vcombine.low %v3162, %v3169
    %v3171 = vcombine.low %v1708, %v1712
    %v3172 = vcombine.low %v1716, %v1720
    %v3173 = vcombine.low %v1724, %v1728
    %v3174 = vcombine.low %v1732, %v1736
    %v3176 = vunpack.c.l.s4 1966171168
    %v3177 = vunpack.c.0.s8 %v3176
    %v3178 = vlaneseq
    %v3179 = vshrl.u32 %v3178, 7
    %v3180 = vsub.s32 %v3177, %v3179
    %v3181 = vrot.slane %v3171, %v3180
    %v3183 = vunpack.c.l.s4 1966171168
    %v3184 = vunpack.c.0.s8 %v3183
    %v3185 = vlaneseq
    %v3186 = vshrl.u32 %v3185, 7
    %v3187 = vsub.s32 %v3184, %v3186
    %v3188 = vrot.slane %v3172, %v3187
    %v3190 = vunpack.c.l.s4 1966171168
    %v3191 = vunpack.c.0.s8 %v3190
    %v3192 = vlaneseq
    %v3193 = vshrl.u32 %v3192, 7
    %v3194 = vsub.s32 %v3191, %v3193
    %v3195 = vrot.slane %v3173, %v3194
    %v3197 = vunpack.c.l.s4 1966171168
    %v3198 = vunpack.c.0.s8 %v3197
    %v3199 = vlaneseq
    %v3200 = vshrl.u32 %v3199, 7
    %v3201 = vsub.s32 %v3198, %v3200
    %v3202 = vrot.slane %v3174, %v3201
    %v3203 = vcombine.low %v3181, %v3188
    %v3204 = vcombine.low %v3195, %v3202
    %v3206 = vunpack.c.l.s4 1966171168
    %v3207 = vunpack.c.0.s8 %v3206
    %v3208 = vlaneseq
    %v3209 = vshrl.u32 %v3208, 7
    %v3210 = vsub.s32 %v3207, %v3209
    %v3211 = vrot.slane %v3203, %v3210
    %v3213 = vunpack.c.l.s4 1966171168
    %v3214 = vunpack.c.0.s8 %v3213
    %v3215 = vlaneseq
    %v3216 = vshrl.u32 %v3215, 7
    %v3217 = vsub.s32 %v3214, %v3216
    %v3218 = vrot.slane %v3204, %v3217
    %v3219 = vcombine.low %v3211, %v3218
    %v3220 = vcombine.low %v1740, %v1744
    %v3221 = vcombine.low %v1748, %v1752
    %v3222 = vcombine.low %v1756, %v1760
    %v3223 = vcombine.low %v1764, %v1768
    %v3225 = vunpack.c.l.s4 1966171168
    %v3226 = vunpack.c.0.s8 %v3225
    %v3227 = vlaneseq
    %v3228 = vshrl.u32 %v3227, 7
    %v3229 = vsub.s32 %v3226, %v3228
    %v3230 = vrot.slane %v3220, %v3229
    %v3232 = vunpack.c.l.s4 1966171168
    %v3233 = vunpack.c.0.s8 %v3232
    %v3234 = vlaneseq
    %v3235 = vshrl.u32 %v3234, 7
    %v3236 = vsub.s32 %v3233, %v3235
    %v3237 = vrot.slane %v3221, %v3236
    %v3239 = vunpack.c.l.s4 1966171168
    %v3240 = vunpack.c.0.s8 %v3239
    %v3241 = vlaneseq
    %v3242 = vshrl.u32 %v3241, 7
    %v3243 = vsub.s32 %v3240, %v3242
    %v3244 = vrot.slane %v3222, %v3243
    %v3246 = vunpack.c.l.s4 1966171168
    %v3247 = vunpack.c.0.s8 %v3246
    %v3248 = vlaneseq
    %v3249 = vshrl.u32 %v3248, 7
    %v3250 = vsub.s32 %v3247, %v3249
    %v3251 = vrot.slane %v3223, %v3250
    %v3252 = vcombine.low %v3230, %v3237
    %v3253 = vcombine.low %v3244, %v3251
    %v3255 = vunpack.c.l.s4 1966171168
    %v3256 = vunpack.c.0.s8 %v3255
    %v3257 = vlaneseq
    %v3258 = vshrl.u32 %v3257, 7
    %v3259 = vsub.s32 %v3256, %v3258
    %v3260 = vrot.slane %v3252, %v3259
    %v3262 = vunpack.c.l.s4 1966171168
    %v3263 = vunpack.c.0.s8 %v3262
    %v3264 = vlaneseq
    %v3265 = vshrl.u32 %v3264, 7
    %v3266 = vsub.s32 %v3263, %v3265
    %v3267 = vrot.slane %v3253, %v3266
    %v3268 = vcombine.low %v3260, %v3267
    %v3269 = vcombine.low %v1772, %v1776
    %v3270 = vcombine.low %v1780, %v1784
    %v3271 = vcombine.low %v1788, %v1792
    %v3272 = vcombine.low %v1796, %v1800
    %v3274 = vunpack.c.l.s4 1966171168
    %v3275 = vunpack.c.0.s8 %v3274
    %v3276 = vlaneseq
    %v3277 = vshrl.u32 %v3276, 7
    %v3278 = vsub.s32 %v3275, %v3277
    %v3279 = vrot.slane %v3269, %v3278
    %v3281 = vunpack.c.l.s4 1966171168
    %v3282 = vunpack.c.0.s8 %v3281
    %v3283 = vlaneseq
    %v3284 = vshrl.u32 %v3283, 7
    %v3285 = vsub.s32 %v3282, %v3284
    %v3286 = vrot.slane %v3270, %v3285
    %v3288 = vunpack.c.l.s4 1966171168
    %v3289 = vunpack.c.0.s8 %v3288
    %v3290 = vlaneseq
    %v3291 = vshrl.u32 %v3290, 7
    %v3292 = vsub.s32 %v3289, %v3291
    %v3293 = vrot.slane %v3271, %v3292
    %v3295 = vunpack.c.l.s4 1966171168
    %v3296 = vunpack.c.0.s8 %v3295
    %v3297 = vlaneseq
    %v3298 = vshrl.u32 %v3297, 7
    %v3299 = vsub.s32 %v3296, %v3298
    %v3300 = vrot.slane %v3272, %v3299
    %v3301 = vcombine.low %v3279, %v3286
    %v3302 = vcombine.low %v3293, %v3300
    %v3304 = vunpack.c.l.s4 1966171168
    %v3305 = vunpack.c.0.s8 %v3304
    %v3306 = vlaneseq
    %v3307 = vshrl.u32 %v3306, 7
    %v3308 = vsub.s32 %v3305, %v3307
    %v3309 = vrot.slane %v3301, %v3308
    %v3311 = vunpack.c.l.s4 1966171168
    %v3312 = vunpack.c.0.s8 %v3311
    %v3313 = vlaneseq
    %v3314 = vshrl.u32 %v3313, 7
    %v3315 = vsub.s32 %v3312, %v3314
    %v3316 = vrot.slane %v3302, %v3315
    %v3317 = vcombine.low %v3309, %v3316
    %v3318 = vcombine.low %v1804, %v1808
    %v3319 = vcombine.low %v1812, %v1816
    %v3320 = vcombine.low %v1820, %v1824
    %v3321 = vcombine.low %v1828, %v1832
    %v3323 = vunpack.c.l.s4 1966171168
    %v3324 = vunpack.c.0.s8 %v3323
    %v3325 = vlaneseq
    %v3326 = vshrl.u32 %v3325, 7
    %v3327 = vsub.s32 %v3324, %v3326
    %v3328 = vrot.slane %v3318, %v3327
    %v3330 = vunpack.c.l.s4 1966171168
    %v3331 = vunpack.c.0.s8 %v3330
    %v3332 = vlaneseq
    %v3333 = vshrl.u32 %v3332, 7
    %v3334 = vsub.s32 %v3331, %v3333
    %v3335 = vrot.slane %v3319, %v3334
    %v3337 = vunpack.c.l.s4 1966171168
    %v3338 = vunpack.c.0.s8 %v3337
    %v3339 = vlaneseq
    %v3340 = vshrl.u32 %v3339, 7
    %v3341 = vsub.s32 %v3338, %v3340
    %v3342 = vrot.slane %v3320, %v3341
    %v3344 = vunpack.c.l.s4 1966171168
    %v3345 = vunpack.c.0.s8 %v3344
    %v3346 = vlaneseq
    %v3347 = vshrl.u32 %v3346, 7
    %v3348 = vsub.s32 %v3345, %v3347
    %v3349 = vrot.slane %v3321, %v3348
    %v3350 = vcombine.low %v3328, %v3335
    %v3351 = vcombine.low %v3342, %v3349
    %v3353 = vunpack.c.l.s4 1966171168
    %v3354 = vunpack.c.0.s8 %v3353
    %v3355 = vlaneseq
    %v3356 = vshrl.u32 %v3355, 7
    %v3357 = vsub.s32 %v3354, %v3356
    %v3358 = vrot.slane %v3350, %v3357
    %v3360 = vunpack.c.l.s4 1966171168
    %v3361 = vunpack.c.0.s8 %v3360
    %v3362 = vlaneseq
    %v3363 = vshrl.u32 %v3362, 7
    %v3364 = vsub.s32 %v3361, %v3363
    %v3365 = vrot.slane %v3351, %v3364
    %v3366 = vcombine.low %v3358, %v3365
    %v3367 = vcombine.low %v1836, %v1840
    %v3368 = vcombine.low %v1844, %v1848
    %v3369 = vcombine.low %v1852, %v1856
    %v3370 = vcombine.low %v1860, %v1864
    %v3372 = vunpack.c.l.s4 1966171168
    %v3373 = vunpack.c.0.s8 %v3372
    %v3374 = vlaneseq
    %v3375 = vshrl.u32 %v3374, 7
    %v3376 = vsub.s32 %v3373, %v3375
    %v3377 = vrot.slane %v3367, %v3376
    %v3379 = vunpack.c.l.s4 1966171168
    %v3380 = vunpack.c.0.s8 %v3379
    %v3381 = vlaneseq
    %v3382 = vshrl.u32 %v3381, 7
    %v3383 = vsub.s32 %v3380, %v3382
    %v3384 = vrot.slane %v3368, %v3383
    %v3386 = vunpack.c.l.s4 1966171168
    %v3387 = vunpack.c.0.s8 %v3386
    %v3388 = vlaneseq
    %v3389 = vshrl.u32 %v3388, 7
    %v3390 = vsub.s32 %v3387, %v3389
    %v3391 = vrot.slane %v3369, %v3390
    %v3393 = vunpack.c.l.s4 1966171168
    %v3394 = vunpack.c.0.s8 %v3393
    %v3395 = vlaneseq
    %v3396 = vshrl.u32 %v3395, 7
    %v3397 = vsub.s32 %v3394, %v3396
    %v3398 = vrot.slane %v3370, %v3397
    %v3399 = vcombine.low %v3377, %v3384
    %v3400 = vcombine.low %v3391, %v3398
    %v3402 = vunpack.c.l.s4 1966171168
    %v3403 = vunpack.c.0.s8 %v3402
    %v3404 = vlaneseq
    %v3405 = vshrl.u32 %v3404, 7
    %v3406 = vsub.s32 %v3403, %v3405
    %v3407 = vrot.slane %v3399, %v3406
    %v3409 = vunpack.c.l.s4 1966171168
    %v3410 = vunpack.c.0.s8 %v3409
    %v3411 = vlaneseq
    %v3412 = vshrl.u32 %v3411, 7
    %v3413 = vsub.s32 %v3410, %v3412
    %v3414 = vrot.slane %v3400, %v3413
    %v3415 = vcombine.low %v3407, %v3414
    %v3416 = vcombine.low %v1868, %v1872
    %v3417 = vcombine.low %v1876, %v1880
    %v3418 = vcombine.low %v1884, %v1888
    %v3419 = vcombine.low %v1892, %v1896
    %v3421 = vunpack.c.l.s4 1966171168
    %v3422 = vunpack.c.0.s8 %v3421
    %v3423 = vlaneseq
    %v3424 = vshrl.u32 %v3423, 7
    %v3425 = vsub.s32 %v3422, %v3424
    %v3426 = vrot.slane %v3416, %v3425
    %v3428 = vunpack.c.l.s4 1966171168
    %v3429 = vunpack.c.0.s8 %v3428
    %v3430 = vlaneseq
    %v3431 = vshrl.u32 %v3430, 7
    %v3432 = vsub.s32 %v3429, %v3431
    %v3433 = vrot.slane %v3417, %v3432
    %v3435 = vunpack.c.l.s4 1966171168
    %v3436 = vunpack.c.0.s8 %v3435
    %v3437 = vlaneseq
    %v3438 = vshrl.u32 %v3437, 7
    %v3439 = vsub.s32 %v3436, %v3438
    %v3440 = vrot.slane %v3418, %v3439
    %v3442 = vunpack.c.l.s4 1966171168
    %v3443 = vunpack.c.0.s8 %v3442
    %v3444 = vlaneseq
    %v3445 = vshrl.u32 %v3444, 7
    %v3446 = vsub.s32 %v3443, %v3445
    %v3447 = vrot.slane %v3419, %v3446
    %v3448 = vcombine.low %v3426, %v3433
    %v3449 = vcombine.low %v3440, %v3447
    %v3451 = vunpack.c.l.s4 1966171168
    %v3452 = vunpack.c.0.s8 %v3451
    %v3453 = vlaneseq
    %v3454 = vshrl.u32 %v3453, 7
    %v3455 = vsub.s32 %v3452, %v3454
    %v3456 = vrot.slane %v3448, %v3455
    %v3458 = vunpack.c.l.s4 1966171168
    %v3459 = vunpack.c.0.s8 %v3458
    %v3460 = vlaneseq
    %v3461 = vshrl.u32 %v3460, 7
    %v3462 = vsub.s32 %v3459, %v3461
    %v3463 = vrot.slane %v3449, %v3462
    %v3464 = vcombine.low %v3456, %v3463
    %3465 = vset.pattern.permute.xlu0 0
    %3466 = vperm.xlu0 %3465, %v1945
    %v3467 = vpop.permute.xlu0 %3466
    %3468 = vset.pattern.permute.xlu0 0
    %3469 = vperm.xlu0 %3468, %v1994
    %v3470 = vpop.permute.xlu0 %3469
    %3471 = vset.pattern.permute.xlu0 0
    %3472 = vperm.xlu0 %3471, %v2043
    %v3473 = vpop.permute.xlu0 %3472
    %3474 = vset.pattern.permute.xlu0 0
    %3475 = vperm.xlu0 %3474, %v2092
    %v3476 = vpop.permute.xlu0 %3475
    %3477 = vset.pattern.permute.xlu0 0
    %3478 = vperm.xlu0 %3477, %v2141
    %v3479 = vpop.permute.xlu0 %3478
    %3480 = vset.pattern.permute.xlu0 0
    %3481 = vperm.xlu0 %3480, %v2190
    %v3482 = vpop.permute.xlu0 %3481
    %3483 = vset.pattern.permute.xlu0 0
    %3484 = vperm.xlu0 %3483, %v2239
    %v3485 = vpop.permute.xlu0 %3484
    %3486 = vset.pattern.permute.xlu0 0
    %3487 = vperm.xlu0 %3486, %v2288
    %v3488 = vpop.permute.xlu0 %3487
    %3489 = vset.pattern.permute.xlu0 0
    %3490 = vperm.xlu0 %3489, %v2337
    %v3491 = vpop.permute.xlu0 %3490
    %3492 = vset.pattern.permute.xlu0 0
    %3493 = vperm.xlu0 %3492, %v2386
    %v3494 = vpop.permute.xlu0 %3493
    %3495 = vset.pattern.permute.xlu0 0
    %3496 = vperm.xlu0 %3495, %v2435
    %v3497 = vpop.permute.xlu0 %3496
    %3498 = vset.pattern.permute.xlu0 0
    %3499 = vperm.xlu0 %3498, %v2484
    %v3500 = vpop.permute.xlu0 %3499
    %3501 = vset.pattern.permute.xlu0 0
    %3502 = vperm.xlu0 %3501, %v2533
    %v3503 = vpop.permute.xlu0 %3502
    %3504 = vset.pattern.permute.xlu0 0
    %3505 = vperm.xlu0 %3504, %v2582
    %v3506 = vpop.permute.xlu0 %3505
    %3507 = vset.pattern.permute.xlu0 0
    %3508 = vperm.xlu0 %3507, %v2631
    %v3509 = vpop.permute.xlu0 %3508
    %3510 = vset.pattern.permute.xlu0 0
    %3511 = vperm.xlu0 %3510, %v2680
    %v3512 = vpop.permute.xlu0 %3511
    %3513 = vset.pattern.permute.xlu0 0
    %3514 = vperm.xlu0 %3513, %v2729
    %v3515 = vpop.permute.xlu0 %3514
    %3516 = vset.pattern.permute.xlu0 0
    %3517 = vperm.xlu0 %3516, %v2778
    %v3518 = vpop.permute.xlu0 %3517
    %3519 = vset.pattern.permute.xlu0 0
    %3520 = vperm.xlu0 %3519, %v2827
    %v3521 = vpop.permute.xlu0 %3520
    %3522 = vset.pattern.permute.xlu0 0
    %3523 = vperm.xlu0 %3522, %v2876
    %v3524 = vpop.permute.xlu0 %3523
    %3525 = vset.pattern.permute.xlu0 0
    %3526 = vperm.xlu0 %3525, %v2925
    %v3527 = vpop.permute.xlu0 %3526
    %3528 = vset.pattern.permute.xlu0 0
    %3529 = vperm.xlu0 %3528, %v2974
    %v3530 = vpop.permute.xlu0 %3529
    %3531 = vset.pattern.permute.xlu0 0
    %3532 = vperm.xlu0 %3531, %v3023
    %v3533 = vpop.permute.xlu0 %3532
    %3534 = vset.pattern.permute.xlu0 0
    %3535 = vperm.xlu0 %3534, %v3072
    %v3536 = vpop.permute.xlu0 %3535
    %3537 = vset.pattern.permute.xlu0 0
    %3538 = vperm.xlu0 %3537, %v3121
    %v3539 = vpop.permute.xlu0 %3538
    %3540 = vset.pattern.permute.xlu0 0
    %3541 = vperm.xlu0 %3540, %v3170
    %v3542 = vpop.permute.xlu0 %3541
    %3543 = vset.pattern.permute.xlu0 0
    %3544 = vperm.xlu0 %3543, %v3219
    %v3545 = vpop.permute.xlu0 %3544
    %3546 = vset.pattern.permute.xlu0 0
    %3547 = vperm.xlu0 %3546, %v3268
    %v3548 = vpop.permute.xlu0 %3547
    %3549 = vset.pattern.permute.xlu0 0
    %3550 = vperm.xlu0 %3549, %v3317
    %v3551 = vpop.permute.xlu0 %3550
    %3552 = vset.pattern.permute.xlu0 0
    %3553 = vperm.xlu0 %3552, %v3366
    %v3554 = vpop.permute.xlu0 %3553
    %3555 = vset.pattern.permute.xlu0 0
    %3556 = vperm.xlu0 %3555, %v3415
    %v3557 = vpop.permute.xlu0 %3556
    %3558 = vset.pattern.permute.xlu0 0
    %3559 = vperm.xlu0 %3558, %v3464
    %v3560 = vpop.permute.xlu0 %3559
    %v3561 = vlaneseq
    %v3562 = vand.u32 %v3561, 127
    %v3563 = vlaneseq
    %v3564 = vshrl.u32 %v3563, 7
    %v3565 = vsub.s32 %v3562, %v3564
    %v3566 = vrot.slane %v3467, %v3565
    %v3567 = vadd.s32 %v3562, 4294967288
    %v3568 = vlaneseq
    %v3569 = vshrl.u32 %v3568, 7
    %v3570 = vsub.s32 %v3567, %v3569
    %v3571 = vrot.slane %v3470, %v3570
    %vm3572 = vcmask 130112
    %v3573 = vsel %vm3572, %v3571, %v3566
    %v3574 = vadd.s32 %v3562, 4294967280
    %v3575 = vlaneseq
    %v3576 = vshrl.u32 %v3575, 7
    %v3577 = vsub.s32 %v3574, %v3576
    %v3578 = vrot.slane %v3473, %v3577
    %vm3579 = vcmask 195712
    %v3580 = vsel %vm3579, %v3578, %v3573
    %v3581 = vadd.s32 %v3562, 4294967272
    %v3582 = vlaneseq
    %v3583 = vshrl.u32 %v3582, 7
    %v3584 = vsub.s32 %v3581, %v3583
    %v3585 = vrot.slane %v3476, %v3584
    %vm3586 = vcmask 261312
    %v3587 = vsel %vm3586, %v3585, %v3580
    %v3588 = vadd.s32 %v3562, 4294967264
    %v3589 = vlaneseq
    %v3590 = vshrl.u32 %v3589, 7
    %v3591 = vsub.s32 %v3588, %v3590
    %v3592 = vrot.slane %v3479, %v3591
    %vm3593 = vcmask 326912
    %v3594 = vsel %vm3593, %v3592, %v3587
    %v3595 = vadd.s32 %v3562, 4294967256
    %v3596 = vlaneseq
    %v3597 = vshrl.u32 %v3596, 7
    %v3598 = vsub.s32 %v3595, %v3597
    %v3599 = vrot.slane %v3482, %v3598
    %vm3600 = vcmask 392512
    %v3601 = vsel %vm3600, %v3599, %v3594
    %v3602 = vadd.s32 %v3562, 4294967248
    %v3603 = vlaneseq
    %v3604 = vshrl.u32 %v3603, 7
    %v3605 = vsub.s32 %v3602, %v3604
    %v3606 = vrot.slane %v3485, %v3605
    %vm3607 = vcmask 458112
    %v3608 = vsel %vm3607, %v3606, %v3601
    %v3609 = vadd.s32 %v3562, 4294967240
    %v3610 = vlaneseq
    %v3611 = vshrl.u32 %v3610, 7
    %v3612 = vsub.s32 %v3609, %v3611
    %v3613 = vrot.slane %v3488, %v3612
    %vm3614 = vcmask 523712
    %v3615 = vsel %vm3614, %v3613, %v3608
    %v3616 = vadd.s32 %v3562, 4294967232
    %v3617 = vlaneseq
    %v3618 = vshrl.u32 %v3617, 7
    %v3619 = vsub.s32 %v3616, %v3618
    %v3620 = vrot.slane %v3491, %v3619
    %vm3621 = vcmask 589312
    %v3622 = vsel %vm3621, %v3620, %v3615
    %v3623 = vadd.s32 %v3562, 4294967224
    %v3624 = vlaneseq
    %v3625 = vshrl.u32 %v3624, 7
    %v3626 = vsub.s32 %v3623, %v3625
    %v3627 = vrot.slane %v3494, %v3626
    %vm3628 = vcmask 654912
    %v3629 = vsel %vm3628, %v3627, %v3622
    %v3630 = vadd.s32 %v3562, 4294967216
    %v3631 = vlaneseq
    %v3632 = vshrl.u32 %v3631, 7
    %v3633 = vsub.s32 %v3630, %v3632
    %v3634 = vrot.slane %v3497, %v3633
    %vm3635 = vcmask 720512
    %v3636 = vsel %vm3635, %v3634, %v3629
    %v3637 = vadd.s32 %v3562, 4294967208
    %v3638 = vlaneseq
    %v3639 = vshrl.u32 %v3638, 7
    %v3640 = vsub.s32 %v3637, %v3639
    %v3641 = vrot.slane %v3500, %v3640
    %vm3642 = vcmask 786112
    %v3643 = vsel %vm3642, %v3641, %v3636
    %v3644 = vadd.s32 %v3562, 4294967200
    %v3645 = vlaneseq
    %v3646 = vshrl.u32 %v3645, 7
    %v3647 = vsub.s32 %v3644, %v3646
    %v3648 = vrot.slane %v3503, %v3647
    %vm3649 = vcmask 851712
    %v3650 = vsel %vm3649, %v3648, %v3643
    %v3651 = vadd.s32 %v3562, 4294967192
    %v3652 = vlaneseq
    %v3653 = vshrl.u32 %v3652, 7
    %v3654 = vsub.s32 %v3651, %v3653
    %v3655 = vrot.slane %v3506, %v3654
    %vm3656 = vcmask 917312
    %v3657 = vsel %vm3656, %v3655, %v3650
    %v3658 = vadd.s32 %v3562, 4294967184
    %v3659 = vlaneseq
    %v3660 = vshrl.u32 %v3659, 7
    %v3661 = vsub.s32 %v3658, %v3660
    %v3662 = vrot.slane %v3509, %v3661
    %vm3663 = vcmask 982912
    %v3664 = vsel %vm3663, %v3662, %v3657
    %v3665 = vadd.s32 %v3562, 4294967176
    %v3666 = vlaneseq
    %v3667 = vshrl.u32 %v3666, 7
    %v3668 = vsub.s32 %v3665, %v3667
    %v3669 = vrot.slane %v3512, %v3668
    %vm3670 = vcmask 1048512
    %v3671 = vsel %vm3670, %v3669, %v3664
    %v3672 = vlaneseq
    %v3673 = vshrl.u32 %v3672, 7
    %v3674 = vsub.s32 %v3562, %v3673
    %v3675 = vrot.slane %v3515, %v3674
    %v3676 = vlaneseq
    %v3677 = vshrl.u32 %v3676, 7
    %v3678 = vsub.s32 %v3567, %v3677
    %v3679 = vrot.slane %v3518, %v3678
    %v3680 = vsel %vm3572, %v3679, %v3675
    %v3681 = vlaneseq
    %v3682 = vshrl.u32 %v3681, 7
    %v3683 = vsub.s32 %v3574, %v3682
    %v3684 = vrot.slane %v3521, %v3683
    %v3685 = vsel %vm3579, %v3684, %v3680
    %v3686 = vlaneseq
    %v3687 = vshrl.u32 %v3686, 7
    %v3688 = vsub.s32 %v3581, %v3687
    %v3689 = vrot.slane %v3524, %v3688
    %v3690 = vsel %vm3586, %v3689, %v3685
    %v3691 = vlaneseq
    %v3692 = vshrl.u32 %v3691, 7
    %v3693 = vsub.s32 %v3588, %v3692
    %v3694 = vrot.slane %v3527, %v3693
    %v3695 = vsel %vm3593, %v3694, %v3690
    %v3696 = vlaneseq
    %v3697 = vshrl.u32 %v3696, 7
    %v3698 = vsub.s32 %v3595, %v3697
    %v3699 = vrot.slane %v3530, %v3698
    %v3700 = vsel %vm3600, %v3699, %v3695
    %v3701 = vlaneseq
    %v3702 = vshrl.u32 %v3701, 7
    %v3703 = vsub.s32 %v3602, %v3702
    %v3704 = vrot.slane %v3533, %v3703
    %v3705 = vsel %vm3607, %v3704, %v3700
    %v3706 = vlaneseq
    %v3707 = vshrl.u32 %v3706, 7
    %v3708 = vsub.s32 %v3609, %v3707
    %v3709 = vrot.slane %v3536, %v3708
    %v3710 = vsel %vm3614, %v3709, %v3705
    %v3711 = vlaneseq
    %v3712 = vshrl.u32 %v3711, 7
    %v3713 = vsub.s32 %v3616, %v3712
    %v3714 = vrot.slane %v3539, %v3713
    %v3715 = vsel %vm3621, %v3714, %v3710
    %v3716 = vlaneseq
    %v3717 = vshrl.u32 %v3716, 7
    %v3718 = vsub.s32 %v3623, %v3717
    %v3719 = vrot.slane %v3542, %v3718
    %v3720 = vsel %vm3628, %v3719, %v3715
    %v3721 = vlaneseq
    %v3722 = vshrl.u32 %v3721, 7
    %v3723 = vsub.s32 %v3630, %v3722
    %v3724 = vrot.slane %v3545, %v3723
    %v3725 = vsel %vm3635, %v3724, %v3720
    %v3726 = vlaneseq
    %v3727 = vshrl.u32 %v3726, 7
    %v3728 = vsub.s32 %v3637, %v3727
    %v3729 = vrot.slane %v3548, %v3728
    %v3730 = vsel %vm3642, %v3729, %v3725
    %v3731 = vlaneseq
    %v3732 = vshrl.u32 %v3731, 7
    %v3733 = vsub.s32 %v3644, %v3732
    %v3734 = vrot.slane %v3551, %v3733
    %v3735 = vsel %vm3649, %v3734, %v3730
    %v3736 = vlaneseq
    %v3737 = vshrl.u32 %v3736, 7
    %v3738 = vsub.s32 %v3651, %v3737
    %v3739 = vrot.slane %v3554, %v3738
    %v3740 = vsel %vm3656, %v3739, %v3735
    %v3741 = vlaneseq
    %v3742 = vshrl.u32 %v3741, 7
    %v3743 = vsub.s32 %v3658, %v3742
    %v3744 = vrot.slane %v3557, %v3743
    %v3745 = vsel %vm3663, %v3744, %v3740
    %v3746 = vlaneseq
    %v3747 = vshrl.u32 %v3746, 7
    %v3748 = vsub.s32 %v3665, %v3747
    %v3749 = vrot.slane %v3560, %v3748
    %v3750 = vsel %vm3670, %v3749, %v3745
    %v3751 = vcombine.low %v3671, %v3750
    %v3753 = vunpack.c.l.s4 1966171168
    %v3754 = vunpack.c.0.s8 %v3753
    %v3755 = vlaneseq
    %v3756 = vshrl.u32 %v3755, 7
    %v3757 = vsub.s32 %v3754, %v3756
    %v3758 = vrot.slane %v3751, %v3757
    %v3760 = vunpack.c.l.s4 1966171168
    %v3761 = vunpack.c.0.s8 %v3760
    %v3762 = vlaneseq
    %v3763 = vshrl.u32 %v3762, 7
    %v3764 = vsub.s32 %v3761, %v3763
    %v3765 = vrot.slane %v3758, %v3764
    %v3767 = vlaneseq
    %vm3768 = vcmp.ge.s32.totalorder %v3767, 0
    %vm3769 = vcmp.lt.s32.totalorder %v3767, 256
    %vm3770 = vmand %vm3768, %vm3769
    %3771 = vst.msk [vmem:[#allocation7] sm:$0x3] %vm3770, %v3765
    // Predicated region
    $region18: #{tpu_custom_call.1} parent=1 // pred_check
      _
    $region19: #{tpu_custom_call.1} parent=1 // pred_check_branch
      %3773 = sbr.rel (0) target = $region21
    $region20: #{tpu_custom_call.1} parent=1 // pred_region
      %s3775 = ssub.s32 32, 32
      %3776 = vsyncadd [#allocation4], %s3775
      %s3778 = sshll.u32 [#allocation7], 4
      %s3779 = int_to_ptr.vmem [resolvable:$true] %s3778
      %3781 = dma.vmem_to_hbm [thread:$0]  %s3779, 32, %s2, [#allocation4]
    $region21: #{tpu_custom_call.1} parent=1 // pred_fallthru
      _
    // Predicated region
    $region22: #{tpu_custom_call.1} parent=1 // pred_check
      _
    $region23: #{tpu_custom_call.1} parent=1 // pred_check_branch
      %3783 = sbr.rel (0) target = $region25
    $region24: #{tpu_custom_call.1} parent=1 // pred_region
      %3784 = dma.done [#allocation4], 32
    $region25: #{tpu_custom_call.1} parent=1 // pred_fallthru
      _
    %3785 = vsyncpa [#allocation3], 1
    %3786 = vsyncpa [#allocation6], 1
    %3787 = vsyncpa [#allocation4], 1

</llo_original>
